<compile_context>
chip_gen: v7x
topology: tpu7x:2x2x1
jax: 0.10.0
libtpu: 0.0.40
codegen_flags: <defaults>
</compile_context>

<pallas_src>
import functools
import math

import jax
import jax.numpy as jnp
from jax import lax
from jax.experimental import pallas as pl
from jax.experimental.pallas import tpu as pltpu

_LANE = 128
_MASK_VALUE = -1e30
_VMEM_LIMIT = 48 * 1024 * 1024


def _round_up(x, m):
    return (x + m - 1) // m * m


def _sublane_for(dtype):
    # f32 -> 8, bf16 -> 16 (packed sublanes).
    return 8 * (4 // jnp.dtype(dtype).itemsize)


# --------------------------------------------------------------------------
# Linear projection kernel: (tile_m, F) @ (F, Fp) + bias, lane-dense output.
# Input keeps its real feature width F (no lane padding of the input in HBM).
# --------------------------------------------------------------------------
def _linear_kernel(x_ref, w_ref, b_ref, o_ref):
    acc = jnp.dot(x_ref[...], w_ref[...], preferred_element_type=jnp.float32)
    o_ref[...] = (acc + b_ref[...].astype(jnp.float32)).astype(o_ref.dtype)


def _linear(x, w, b, *, tile_m):
    """x: (M, Fin), w: (Fin, Fout), b: (1, Fout) -> (M, Fout)."""
    M, Fin = x.shape
    Fout = w.shape[1]
    return pl.pallas_call(
        _linear_kernel,
        out_shape=jax.ShapeDtypeStruct((M, Fout), x.dtype),
        grid_spec=pltpu.PrefetchScalarGridSpec(
            num_scalar_prefetch=0,
            grid=(M // tile_m,),
            in_specs=[
                pl.BlockSpec((tile_m, Fin), lambda i: (i, 0)),
                pl.BlockSpec((Fin, Fout), lambda i: (0, 0)),
                pl.BlockSpec((1, Fout), lambda i: (0, 0)),
            ],
            out_specs=pl.BlockSpec((tile_m, Fout), lambda i: (i, 0)),
        ),
        compiler_params=pltpu.CompilerParams(
            dimension_semantics=("parallel",),
            vmem_limit_bytes=_VMEM_LIMIT,
        ),
    )(x, w, b)


# --------------------------------------------------------------------------
# Flash-style attention kernel with online softmax + fused output projection.
# --------------------------------------------------------------------------
def _flash_attn_kernel(q_ref, k_ref, v_ref, wo_ref, bo_ref, o_ref,
                       m_sc, l_sc, acc_sc, *, kv_len, block_k, masked):
    ki = pl.program_id(2)

    @pl.when(ki == 0)
    def _init():
        m_sc[...] = jnp.full_like(m_sc, _MASK_VALUE)
        l_sc[...] = jnp.zeros_like(l_sc)
        acc_sc[...] = jnp.zeros_like(acc_sc)

    q = q_ref[0]  # (tq, Fp), compute dtype (1/sqrt(F) folded into wq/bq)
    k = k_ref[0]  # (tk, Fp)
    v = v_ref[0]  # (tk, Fp)

    # q . k^T, contracting on the trailing feature dim (no explicit transpose).
    s = lax.dot_general(q, k, (((1,), (1,)), ((), ())),
                        preferred_element_type=jnp.float32)      # (tq, tk) f32

    def _update(scores):
        m_prev = m_sc[...]
        m_new = jnp.maximum(m_prev, jnp.max(scores, axis=-1, keepdims=True))
        alpha = jnp.exp(m_prev - m_new)
        p = jnp.exp(scores - m_new)                               # f32
        l_sc[...] = alpha * l_sc[...] + jnp.sum(p, axis=-1, keepdims=True)
        acc_sc[...] = alpha * acc_sc[...] + jnp.dot(
            p.astype(v.dtype), v, preferred_element_type=jnp.float32)
        m_sc[...] = m_new

    if masked:
        # Padding only ever lands in the last kv tile (t_q | t_k and
        # S_pad = round_up(S, t_k)); skip the per-element mask otherwise.
        needs_mask = (ki + 1) * block_k > kv_len

        @pl.when(needs_mask)
        def _masked_update():
            kv_ids = ki * block_k + lax.broadcasted_iota(jnp.int32, s.shape, 1)
            _update(jnp.where(kv_ids < kv_len, s, _MASK_VALUE))

        @pl.when(jnp.logical_not(needs_mask))
        def _unmasked_update():
            _update(s)
    else:
        _update(s)

    @pl.when(ki == pl.num_programs(2) - 1)
    def _finalize():
        # Exact normalization (once per q tile), then fused output projection.
        ctx = acc_sc[...] / l_sc[...]                             # (tq, Fp) f32
        out = jnp.dot(ctx.astype(wo_ref.dtype), wo_ref[...],
                      preferred_element_type=jnp.float32)
        o_ref[0] = (out + bo_ref[...].astype(jnp.float32)).astype(o_ref.dtype)


def _flash_attention(q, k, v, wo, bo, *, block_q, block_k, kv_len, out_dtype):
    B, Sq, Fp = q.shape
    Skv = k.shape[1]
    masked = (Skv != kv_len)
    kernel = functools.partial(_flash_attn_kernel, kv_len=kv_len,
                               block_k=block_k, masked=masked)
    return pl.pallas_call(
        kernel,
        out_shape=jax.ShapeDtypeStruct((B, Sq, Fp), out_dtype),
        grid_spec=pltpu.PrefetchScalarGridSpec(
            num_scalar_prefetch=0,
            grid=(B, Sq // block_q, Skv // block_k),
            in_specs=[
                pl.BlockSpec((1, block_q, Fp), lambda b, qi, ki: (b, qi, 0)),
                pl.BlockSpec((1, block_k, Fp), lambda b, qi, ki: (b, ki, 0)),
                pl.BlockSpec((1, block_k, Fp), lambda b, qi, ki: (b, ki, 0)),
                pl.BlockSpec((Fp, Fp), lambda b, qi, ki: (0, 0)),
                pl.BlockSpec((1, Fp), lambda b, qi, ki: (0, 0)),
            ],
            out_specs=pl.BlockSpec((1, block_q, Fp),
                                   lambda b, qi, ki: (b, qi, 0)),
            scratch_shapes=[
                pltpu.VMEM((block_q, 1), jnp.float32),   # running max
                pltpu.VMEM((block_q, 1), jnp.float32),   # running denom
                pltpu.VMEM((block_q, Fp), jnp.float32),  # output accumulator
            ],
        ),
        compiler_params=pltpu.CompilerParams(
            dimension_semantics=("parallel", "parallel", "arbitrary"),
            vmem_limit_bytes=_VMEM_LIMIT,
        ),
    )(q, k, v, wo, bo)


# --------------------------------------------------------------------------
# Parameter prep (one-time): pad only the *output* feature dim to Fp and fold
# the 1/sqrt(F) attention scale into the query projection.
# --------------------------------------------------------------------------
def prepare_params(params, num_features, compute_dtype=jnp.bfloat16):
    F = num_features
    Fp = _round_up(F, _LANE)
    scale = 1.0 / math.sqrt(F)

    def pad_w(w, rows):
        out = jnp.zeros((rows, Fp), jnp.float32)
        out = out.at[:F, :F].set(w.astype(jnp.float32))
        return out.astype(compute_dtype)

    def pad_b(b):
        out = jnp.zeros((1, Fp), jnp.float32)
        out = out.at[:, :F].set(b.reshape(1, F).astype(jnp.float32))
        return out.astype(compute_dtype)

    return {
        "wq": pad_w(params["wq"] * scale, F), "bq": pad_b(params["bq"] * scale),
        "wk": pad_w(params["wk"], F),         "bk": pad_b(params["bk"]),
        "wv": pad_w(params["wv"], F),         "bv": pad_b(params["bv"]),
        "wo": pad_w(params["wo"], Fp),        "bo": pad_b(params["bo"]),
    }


# --------------------------------------------------------------------------
# Full forward: Q/K/V projections (batch flattened into M) + flash attention
# with fused output projection.
# --------------------------------------------------------------------------
@functools.partial(jax.jit, static_argnames=("block_q", "block_k"))
def attention_forward(query, key, value, padded_params, *,
                      block_q=256, block_k=1024):
    """query/key/value: (B, S, F).  padded_params: output of prepare_params."""
    B, S, F = query.shape
    Fp = padded_params["wq"].shape[1]
    compute_dtype = padded_params["wq"].dtype
    sublane = _sublane_for(compute_dtype)

    # --- tile selection: t_q always divides t_k; padding < one kv tile. -----
    S_round = _round_up(S, sublane)
    if S_round <= block_k:
        t_k = S_round
        t_q = min(block_q, t_k)
        if t_k % t_q != 0:
            t_q = t_k
    else:
        t_k = block_k
        t_q = min(block_q, t_k)          # both powers of two -> t_q | t_k
    S_pad = _round_up(S, t_k)            # divisible by both t_q and t_k

    def pad_in(x):
        x = x.astype(compute_dtype)
        if S_pad != S:
            x = jnp.pad(x, ((0, 0), (0, S_pad - S), (0, 0)))
        return x

    q3, k3, v3 = pad_in(query), pad_in(key), pad_in(value)

    # --- projections: batch flattened into the matmul M dimension. ----------
    # TODO(synk): when query is key is value (self-attention), the three
    # projections could be fused into one (F, 3*Fp) matmul to read the input
    # once; kept separate here for cross-attention generality.
    M = B * S_pad
    tile_m = t_q
    while tile_m * 2 <= 1024 and M % (tile_m * 2) == 0 and M // (tile_m * 2) >= 2:
        tile_m *= 2

    q2 = q3.reshape(M, F)
    k2 = k3.reshape(M, F)
    v2 = v3.reshape(M, F)

    qp = _linear(q2, padded_params["wq"], padded_params["bq"], tile_m=tile_m)
    kp = _linear(k2, padded_params["wk"], padded_params["bk"], tile_m=tile_m)
    vp = _linear(v2, padded_params["wv"], padded_params["bv"], tile_m=tile_m)

    # --- flash attention + fused output projection. --------------------------
    # TODO(synk): nn.Dropout layers (attn probs + post-projection) are identity
    # here (eval-mode inference semantics).
    out = _flash_attention(qp.reshape(B, S_pad, Fp),
                           kp.reshape(B, S_pad, Fp),
                           vp.reshape(B, S_pad, Fp),
                           padded_params["wo"], padded_params["bo"],
                           block_q=t_q, block_k=t_k, kv_len=S,
                           out_dtype=query.dtype)

    return out[:, :S, :F]


# --------------------------------------------------------------------------
# Reference + test harness.
# --------------------------------------------------------------------------
def _init_linear(key, fan_in, fan_out):
    # Mimics nn.Linear's uniform(-1/sqrt(fan_in), 1/sqrt(fan_in)) init.
    kw, kb = jax.random.split(key)
    bound = 1.0 / math.sqrt(fan_in)
    w = jax.random.uniform(kw, (fan_in, fan_out), jnp.float32, -bound, bound)
    b = jax.random.uniform(kb, (1, fan_out), jnp.float32, -bound, bound)
    return w, b


def _reference(query, key, value, params):
    # Pure-JAX f32 reference of the PyTorch forward (eval mode).
    F = query.shape[-1]
    q = query @ params["wq"] + params["bq"]
    k = key @ params["wk"] + params["bk"]
    v = value @ params["wv"] + params["bv"]
    scores = (q / jnp.sqrt(jnp.float32(F))) @ jnp.swapaxes(k, -1, -2)
    attn = jax.nn.softmax(scores, axis=-1)
    ctx = attn @ v
    return ctx @ params["wo"] + params["bo"]


if __name__ == "__main__":
    B, S, F = 2, 8, 32

    root = jax.random.PRNGKey(0)
    k_q, k_k, k_v, k_o, k_in = jax.random.split(root, 5)

    wq, bq = _init_linear(k_q, F, F)
    wk, bk = _init_linear(k_k, F, F)
    wv, bv = _init_linear(k_v, F, F)
    wo, bo = _init_linear(k_o, F, F)
    params = dict(wq=wq, bq=bq, wk=wk, bk=bk, wv=wv, bv=bv, wo=wo, bo=bo)

    # One-time padded / scale-folded params; bfloat16 feeds the MXU at full
    # rate on v5e/v6e/v7x (all dots accumulate in f32).
    padded = prepare_params(params, F, compute_dtype=jnp.bfloat16)

    kq_in, kk_in, kv_in = jax.random.split(k_in, 3)
    query = jax.random.normal(kq_in, (B, S, F), jnp.float32)
    key = jax.random.normal(kk_in, (B, S, F), jnp.float32)
    value = jax.random.normal(kv_in, (B, S, F), jnp.float32)

    out = attention_forward(query, key, value, padded)
    out = jax.block_until_ready(out)

    ref = _reference(query, key, value, params)
    assert out.shape == (B, S, F)
    # Tolerance accommodates bfloat16 inputs/weights (f32 accumulation and
    # exact softmax normalization otherwise).
    assert jnp.allclose(out, ref, atol=3e-2, rtol=3e-2), "mismatch vs reference"

    print("KERNEL_OK")
</pallas_src>

<mosaic_0001>
module attributes {stable_mosaic.version = 11 : i64} {
  func.func @_linear_kernel(%arg0: i32, %arg1: memref<16x32xbf16, #tpu.memory_space<vmem>>, %arg2: memref<32x128xbf16, #tpu.memory_space<vmem>>, %arg3: memref<1x128xbf16, #tpu.memory_space<vmem>>, %arg4: memref<16x128xbf16, #tpu.memory_space<vmem>>) attributes {dimension_semantics = [#tpu.dimension_semantics<parallel>], iteration_bounds = array<i64: 2>, scalar_prefetch = 0 : i64, scratch_operands = 0 : i64, tpu.core_type = #tpu.core_type<tc>, window_params = [{transform_indices = @transform_0, window_bounds = array<i64: 16, 32>}, {pipeline_mode = #tpu.pipeline_mode<synchronous>, transform_indices = @transform_1, window_bounds = array<i64: 32, 128>}, {pipeline_mode = #tpu.pipeline_mode<synchronous>, transform_indices = @transform_2, window_bounds = array<i64: 1, 128>}, {transform_indices = @transform_3, window_bounds = array<i64: 16, 128>}]} {
    %c0 = arith.constant 0 : index
    %c0_0 = arith.constant 0 : index
    %0 = vector.load %arg1[%c0, %c0_0] : memref<16x32xbf16, #tpu.memory_space<vmem>>, vector<16x32xbf16>
    %c0_1 = arith.constant 0 : index
    %c0_2 = arith.constant 0 : index
    %1 = vector.load %arg2[%c0_1, %c0_2] : memref<32x128xbf16, #tpu.memory_space<vmem>>, vector<32x128xbf16>
    %cst = arith.constant dense<0.000000e+00> : vector<16x128xf32>
    %2 = tpu.matmul %0, %1, %cst {dimension_numbers = #tpu.dot_dimension_numbers<[1], [0], [0], [1], [0, 0, 1, 1], [], []>} : vector<16x32xbf16>, vector<32x128xbf16>, vector<16x128xf32> -> vector<16x128xf32>
    %c0_3 = arith.constant 0 : index
    %c0_4 = arith.constant 0 : index
    %3 = vector.load %arg3[%c0_3, %c0_4] : memref<1x128xbf16, #tpu.memory_space<vmem>>, vector<1x128xbf16>
    %4 = arith.extf %3 : vector<1x128xbf16> to vector<1x128xf32>
    %5 = vector.broadcast %4 : vector<1x128xf32> to vector<16x128xf32>
    %6 = arith.addf %2, %5 : vector<16x128xf32>
    %7 = arith.truncf %6 : vector<16x128xf32> to vector<16x128xbf16>
    %c0_5 = arith.constant 0 : index
    %c0_6 = arith.constant 0 : index
    %8 = vector.load %arg4[%c0_5, %c0_6] : memref<16x128xbf16, #tpu.memory_space<vmem>>, vector<16x128xbf16>
    tpu.vector_store %arg4[%c0_5, %c0_6], %7 {strides = array<i32>} : memref<16x128xbf16, #tpu.memory_space<vmem>>, vector<16x128xbf16>,
    return
  }
  func.func @transform_0(%arg0: i32) -> (i32, i32) {
    %c0_i32 = arith.constant 0 : i32
    %c0_i32_0 = arith.constant 0 : i32
    return %arg0, %c0_i32 : i32, i32
  }
  func.func @transform_1(%arg0: i32) -> (i32, i32) {
    %c0_i32 = arith.constant 0 : i32
    %c0_i32_0 = arith.constant 0 : i32
    %c0_i32_1 = arith.constant 0 : i32
    return %c0_i32, %c0_i32_0 : i32, i32
  }
  func.func @transform_2(%arg0: i32) -> (i32, i32) {
    %c0_i32 = arith.constant 0 : i32
    %c0_i32_0 = arith.constant 0 : i32
    %c0_i32_1 = arith.constant 0 : i32
    return %c0_i32, %c0_i32_0 : i32, i32
  }
  func.func @transform_3(%arg0: i32) -> (i32, i32) {
    %c0_i32 = arith.constant 0 : i32
    %c0_i32_0 = arith.constant 0 : i32
    return %arg0, %c0_i32 : i32, i32
  }
}

module attributes {stable_mosaic.version = 11 : i64} {
  func.func @_flash_attn_kernel(%arg0: i32, %arg1: i32, %arg2: i32, %arg3: memref<1x16x128xbf16, #tpu.memory_space<vmem>>, %arg4: memref<1x16x128xbf16, #tpu.memory_space<vmem>>, %arg5: memref<1x16x128xbf16, #tpu.memory_space<vmem>>, %arg6: memref<128x128xbf16, #tpu.memory_space<vmem>>, %arg7: memref<1x128xbf16, #tpu.memory_space<vmem>>, %arg8: memref<1x16x128xf32, #tpu.memory_space<vmem>>, %arg9: memref<16x1xf32, #tpu.memory_space<vmem>>, %arg10: memref<16x1xf32, #tpu.memory_space<vmem>>, %arg11: memref<16x128xf32, #tpu.memory_space<vmem>>) attributes {dimension_semantics = [#tpu.dimension_semantics<parallel>, #tpu.dimension_semantics<parallel>, #tpu.dimension_semantics<arbitrary>], iteration_bounds = array<i64: 2, 1, 1>, scalar_prefetch = 0 : i64, scratch_operands = 3 : i64, tpu.core_type = #tpu.core_type<tc>, window_params = [{transform_indices = @transform_0, window_bounds = array<i64: 1, 16, 128>}, {transform_indices = @transform_1, window_bounds = array<i64: 1, 16, 128>}, {transform_indices = @transform_2, window_bounds = array<i64: 1, 16, 128>}, {pipeline_mode = #tpu.pipeline_mode<synchronous>, transform_indices = @transform_3, window_bounds = array<i64: 128, 128>}, {pipeline_mode = #tpu.pipeline_mode<synchronous>, transform_indices = @transform_4, window_bounds = array<i64: 1, 128>}, {transform_indices = @transform_5, window_bounds = array<i64: 1, 16, 128>}]} {
    %c0_i32 = arith.constant 0 : i32
    %0 = arith.cmpi eq, %arg2, %c0_i32 : i32
    %1 = arith.extui %0 : i1 to i32
    %c0_i32_0 = arith.constant 0 : i32
    %2 = arith.cmpi ne, %1, %c0_i32_0 : i32
    scf.if %2 {
      %cst_13 = arith.constant -1.000000e+30 : f32
      %21 = vector.broadcast %cst_13 : f32 to vector<16x1xf32>
      %c0_14 = arith.constant 0 : index
      %c0_15 = arith.constant 0 : index
      %22 = vector.load %arg9[%c0_14, %c0_15] : memref<16x1xf32, #tpu.memory_space<vmem>>, vector<16x1xf32>
      tpu.vector_store %arg9[%c0_14, %c0_15], %21 {strides = array<i32>} : memref<16x1xf32, #tpu.memory_space<vmem>>, vector<16x1xf32>,
      %cst_16 = arith.constant 0.000000e+00 : f32
      %23 = vector.broadcast %cst_16 : f32 to vector<16x1xf32>
      %c0_17 = arith.constant 0 : index
      %c0_18 = arith.constant 0 : index
      %24 = vector.load %arg10[%c0_17, %c0_18] : memref<16x1xf32, #tpu.memory_space<vmem>>, vector<16x1xf32>
      tpu.vector_store %arg10[%c0_17, %c0_18], %23 {strides = array<i32>} : memref<16x1xf32, #tpu.memory_space<vmem>>, vector<16x1xf32>,
      %cst_19 = arith.constant 0.000000e+00 : f32
      %25 = vector.broadcast %cst_19 : f32 to vector<16x128xf32>
      %c0_20 = arith.constant 0 : index
      %c0_21 = arith.constant 0 : index
      %26 = vector.load %arg11[%c0_20, %c0_21] : memref<16x128xf32, #tpu.memory_space<vmem>>, vector<16x128xf32>
      tpu.vector_store %arg11[%c0_20, %c0_21], %25 {strides = array<i32>} : memref<16x128xf32, #tpu.memory_space<vmem>>, vector<16x128xf32>,
    } else {
    }
    %c0 = arith.constant 0 : index
    %c0_1 = arith.constant 0 : index
    %c0_2 = arith.constant 0 : index
    %3 = vector.load %arg3[%c0, %c0_1, %c0_2] : memref<1x16x128xbf16, #tpu.memory_space<vmem>>, vector<1x16x128xbf16>
    %4 = vector.shape_cast %3 : vector<1x16x128xbf16> to vector<16x128xbf16>
    %c0_3 = arith.constant 0 : index
    %c0_4 = arith.constant 0 : index
    %c0_5 = arith.constant 0 : index
    %5 = vector.load %arg4[%c0_3, %c0_4, %c0_5] : memref<1x16x128xbf16, #tpu.memory_space<vmem>>, vector<1x16x128xbf16>
    %6 = vector.shape_cast %5 : vector<1x16x128xbf16> to vector<16x128xbf16>
    %c0_6 = arith.constant 0 : index
    %c0_7 = arith.constant 0 : index
    %c0_8 = arith.constant 0 : index
    %7 = vector.load %arg5[%c0_6, %c0_7, %c0_8] : memref<1x16x128xbf16, #tpu.memory_space<vmem>>, vector<1x16x128xbf16>
    %8 = vector.shape_cast %7 : vector<1x16x128xbf16> to vector<16x128xbf16>
    %cst = arith.constant dense<0.000000e+00> : vector<16x16xf32>
    %9 = tpu.matmul %4, %6, %cst {dimension_numbers = #tpu.dot_dimension_numbers<[1], [1], [0], [0], [0, 0, 1, 0], [], []>} : vector<16x128xbf16>, vector<16x128xbf16>, vector<16x16xf32> -> vector<16x16xf32>
    %c1_i32 = arith.constant 1 : i32
    %10 = arith.addi %arg2, %c1_i32 : i32
    %c16_i32 = arith.constant 16 : i32
    %11 = arith.muli %10, %c16_i32 : i32
    %c8_i32 = arith.constant 8 : i32
    %12 = arith.cmpi sgt, %11, %c8_i32 : i32
    %13 = arith.extui %12 : i1 to i32
    %c0_i32_9 = arith.constant 0 : i32
    %14 = arith.cmpi ne, %13, %c0_i32_9 : i32
    scf.if %14 {
      %c16_i32_13 = arith.constant 16 : i32
      %21 = arith.muli %arg2, %c16_i32_13 : i32
      %22 = tpu.iota {dimensions = array<i32: 1>} : vector<16x16xi32>
      %23 = vector.broadcast %21 : i32 to vector<16x16xi32>
      %24 = arith.addi %23, %22 : vector<16x16xi32>
      %c8_i32_14 = arith.constant 8 : i32
      %25 = vector.broadcast %c8_i32_14 : i32 to vector<16x16xi32>
      %26 = arith.cmpi slt, %24, %25 : vector<16x16xi32>
      %cst_15 = arith.constant -1.000000e+30 : f32
      %27 = vector.broadcast %cst_15 : f32 to vector<16x16xf32>
      %28 = arith.select %26, %9, %27 : vector<16x16xi1>, vector<16x16xf32>
      %c0_16 = arith.constant 0 : index
      %c0_17 = arith.constant 0 : index
      %29 = vector.load %arg9[%c0_16, %c0_17] : memref<16x1xf32, #tpu.memory_space<vmem>>, vector<16x1xf32>
      %cst_18 = arith.constant dense<0xFF800000> : vector<16xf32>
      %30 = vector.multi_reduction <maximumf>, %28, %cst_18 [1] : vector<16x16xf32> to vector<16xf32>
      %31 = vector.shape_cast %30 : vector<16xf32> to vector<16x1xf32>
      %32 = arith.maximumf %29, %31 : vector<16x1xf32>
      %33 = arith.subf %29, %32 : vector<16x1xf32>
      %34 = math.exp %33 : vector<16x1xf32>
      %35 = vector.broadcast %32 : vector<16x1xf32> to vector<16x16xf32>
      %36 = arith.subf %28, %35 : vector<16x16xf32>
      %37 = math.exp %36 : vector<16x16xf32>
      %c0_19 = arith.constant 0 : index
      %c0_20 = arith.constant 0 : index
      %38 = vector.load %arg10[%c0_19, %c0_20] : memref<16x1xf32, #tpu.memory_space<vmem>>, vector<16x1xf32>
      %39 = arith.mulf %34, %38 : vector<16x1xf32>
      %cst_21 = arith.constant dense<0.000000e+00> : vector<16xf32>
      %40 = vector.multi_reduction <add>, %37, %cst_21 [1] : vector<16x16xf32> to vector<16xf32>
      %41 = vector.shape_cast %40 : vector<16xf32> to vector<16x1xf32>
      %42 = arith.addf %39, %41 : vector<16x1xf32>
      %c0_22 = arith.constant 0 : index
      %c0_23 = arith.constant 0 : index
      %43 = vector.load %arg10[%c0_22, %c0_23] : memref<16x1xf32, #tpu.memory_space<vmem>>, vector<16x1xf32>
      tpu.vector_store %arg10[%c0_22, %c0_23], %42 {strides = array<i32>} : memref<16x1xf32, #tpu.memory_space<vmem>>, vector<16x1xf32>,
      %c0_24 = arith.constant 0 : index
      %c0_25 = arith.constant 0 : index
      %44 = vector.load %arg11[%c0_24, %c0_25] : memref<16x128xf32, #tpu.memory_space<vmem>>, vector<16x128xf32>
      %45 = vector.broadcast %34 : vector<16x1xf32> to vector<16x128xf32>
      %46 = arith.mulf %45, %44 : vector<16x128xf32>
      %47 = arith.truncf %37 : vector<16x16xf32> to vector<16x16xbf16>
      %cst_26 = arith.constant dense<0.000000e+00> : vector<16x128xf32>
      %48 = tpu.matmul %47, %8, %cst_26 {dimension_numbers = #tpu.dot_dimension_numbers<[1], [0], [0], [1], [0, 0, 1, 1], [], []>} : vector<16x16xbf16>, vector<16x128xbf16>, vector<16x128xf32> -> vector<16x128xf32>
      %49 = arith.addf %46, %48 : vector<16x128xf32>
      %c0_27 = arith.constant 0 : index
      %c0_28 = arith.constant 0 : index
      %50 = vector.load %arg11[%c0_27, %c0_28] : memref<16x128xf32, #tpu.memory_space<vmem>>, vector<16x128xf32>
      tpu.vector_store %arg11[%c0_27, %c0_28], %49 {strides = array<i32>} : memref<16x128xf32, #tpu.memory_space<vmem>>, vector<16x128xf32>,
      %c0_29 = arith.constant 0 : index
      %c0_30 = arith.constant 0 : index
      %51 = vector.load %arg9[%c0_29, %c0_30] : memref<16x1xf32, #tpu.memory_space<vmem>>, vector<16x1xf32>
      tpu.vector_store %arg9[%c0_29, %c0_30], %32 {strides = array<i32>} : memref<16x1xf32, #tpu.memory_space<vmem>>, vector<16x1xf32>,
    } else {
    }
    %true = arith.constant true
    %15 = arith.xori %12, %true : i1
    %16 = arith.extui %15 : i1 to i32
    %c0_i32_10 = arith.constant 0 : i32
    %17 = arith.cmpi ne, %16, %c0_i32_10 : i32
    scf.if %17 {
      %c0_13 = arith.constant 0 : index
      %c0_14 = arith.constant 0 : index
      %21 = vector.load %arg9[%c0_13, %c0_14] : memref<16x1xf32, #tpu.memory_space<vmem>>, vector<16x1xf32>
      %cst_15 = arith.constant dense<0xFF800000> : vector<16xf32>
      %22 = vector.multi_reduction <maximumf>, %9, %cst_15 [1] : vector<16x16xf32> to vector<16xf32>
      %23 = vector.shape_cast %22 : vector<16xf32> to vector<16x1xf32>
      %24 = arith.maximumf %21, %23 : vector<16x1xf32>
      %25 = arith.subf %21, %24 : vector<16x1xf32>
      %26 = math.exp %25 : vector<16x1xf32>
      %27 = vector.broadcast %24 : vector<16x1xf32> to vector<16x16xf32>
      %28 = arith.subf %9, %27 : vector<16x16xf32>
      %29 = math.exp %28 : vector<16x16xf32>
      %c0_16 = arith.constant 0 : index
      %c0_17 = arith.constant 0 : index
      %30 = vector.load %arg10[%c0_16, %c0_17] : memref<16x1xf32, #tpu.memory_space<vmem>>, vector<16x1xf32>
      %31 = arith.mulf %26, %30 : vector<16x1xf32>
      %cst_18 = arith.constant dense<0.000000e+00> : vector<16xf32>
      %32 = vector.multi_reduction <add>, %29, %cst_18 [1] : vector<16x16xf32> to vector<16xf32>
      %33 = vector.shape_cast %32 : vector<16xf32> to vector<16x1xf32>
      %34 = arith.addf %31, %33 : vector<16x1xf32>
      %c0_19 = arith.constant 0 : index
      %c0_20 = arith.constant 0 : index
      %35 = vector.load %arg10[%c0_19, %c0_20] : memref<16x1xf32, #tpu.memory_space<vmem>>, vector<16x1xf32>
      tpu.vector_store %arg10[%c0_19, %c0_20], %34 {strides = array<i32>} : memref<16x1xf32, #tpu.memory_space<vmem>>, vector<16x1xf32>,
      %c0_21 = arith.constant 0 : index
      %c0_22 = arith.constant 0 : index
      %36 = vector.load %arg11[%c0_21, %c0_22] : memref<16x128xf32, #tpu.memory_space<vmem>>, vector<16x128xf32>
      %37 = vector.broadcast %26 : vector<16x1xf32> to vector<16x128xf32>
      %38 = arith.mulf %37, %36 : vector<16x128xf32>
      %39 = arith.truncf %29 : vector<16x16xf32> to vector<16x16xbf16>
      %cst_23 = arith.constant dense<0.000000e+00> : vector<16x128xf32>
      %40 = tpu.matmul %39, %8, %cst_23 {dimension_numbers = #tpu.dot_dimension_numbers<[1], [0], [0], [1], [0, 0, 1, 1], [], []>} : vector<16x16xbf16>, vector<16x128xbf16>, vector<16x128xf32> -> vector<16x128xf32>
      %41 = arith.addf %38, %40 : vector<16x128xf32>
      %c0_24 = arith.constant 0 : index
      %c0_25 = arith.constant 0 : index
      %42 = vector.load %arg11[%c0_24, %c0_25] : memref<16x128xf32, #tpu.memory_space<vmem>>, vector<16x128xf32>
      tpu.vector_store %arg11[%c0_24, %c0_25], %41 {strides = array<i32>} : memref<16x128xf32, #tpu.memory_space<vmem>>, vector<16x128xf32>,
      %c0_26 = arith.constant 0 : index
      %c0_27 = arith.constant 0 : index
      %43 = vector.load %arg9[%c0_26, %c0_27] : memref<16x1xf32, #tpu.memory_space<vmem>>, vector<16x1xf32>
      tpu.vector_store %arg9[%c0_26, %c0_27], %24 {strides = array<i32>} : memref<16x1xf32, #tpu.memory_space<vmem>>, vector<16x1xf32>,
    } else {
    }
    %c0_i32_11 = arith.constant 0 : i32
    %18 = arith.cmpi eq, %arg2, %c0_i32_11 : i32
    %19 = arith.extui %18 : i1 to i32
    %c0_i32_12 = arith.constant 0 : i32
    %20 = arith.cmpi ne, %19, %c0_i32_12 : i32
    scf.if %20 {
      %c0_13 = arith.constant 0 : index
      %c0_14 = arith.constant 0 : index
      %21 = vector.load %arg11[%c0_13, %c0_14] : memref<16x128xf32, #tpu.memory_space<vmem>>, vector<16x128xf32>
      %c0_15 = arith.constant 0 : index
      %c0_16 = arith.constant 0 : index
      %22 = vector.load %arg10[%c0_15, %c0_16] : memref<16x1xf32, #tpu.memory_space<vmem>>, vector<16x1xf32>
      %23 = vector.broadcast %22 : vector<16x1xf32> to vector<16x128xf32>
      %24 = arith.divf %21, %23 : vector<16x128xf32>
      %25 = arith.truncf %24 : vector<16x128xf32> to vector<16x128xbf16>
      %c0_17 = arith.constant 0 : index
      %c0_18 = arith.constant 0 : index
      %26 = vector.load %arg6[%c0_17, %c0_18] : memref<128x128xbf16, #tpu.memory_space<vmem>>, vector<128x128xbf16>
      %cst_19 = arith.constant dense<0.000000e+00> : vector<16x128xf32>
      %27 = tpu.matmul %25, %26, %cst_19 {dimension_numbers = #tpu.dot_dimension_numbers<[1], [0], [0], [1], [0, 0, 1, 1], [], []>} : vector<16x128xbf16>, vector<128x128xbf16>, vector<16x128xf32> -> vector<16x128xf32>
      %c0_20 = arith.constant 0 : index
      %c0_21 = arith.constant 0 : index
      %28 = vector.load %arg7[%c0_20, %c0_21] : memref<1x128xbf16, #tpu.memory_space<vmem>>, vector<1x128xbf16>
      %29 = arith.extf %28 : vector<1x128xbf16> to vector<1x128xf32>
      %30 = vector.broadcast %29 : vector<1x128xf32> to vector<16x128xf32>
      %31 = arith.addf %27, %30 : vector<16x128xf32>
      %c0_22 = arith.constant 0 : index
      %c0_23 = arith.constant 0 : index
      %c0_24 = arith.constant 0 : index
      %32 = vector.load %arg8[%c0_22, %c0_23, %c0_24] : memref<1x16x128xf32, #tpu.memory_space<vmem>>, vector<1x16x128xf32>
      %33 = vector.shape_cast %32 : vector<1x16x128xf32> to vector<16x128xf32>
      %34 = vector.shape_cast %31 : vector<16x128xf32> to vector<1x16x128xf32>
      tpu.vector_store %arg8[%c0_22, %c0_23, %c0_24], %34 {strides = array<i32>} : memref<1x16x128xf32, #tpu.memory_space<vmem>>, vector<1x16x128xf32>,
    } else {
    }
    return
  }
  func.func @transform_0(%arg0: i32, %arg1: i32, %arg2: i32) -> (i32, i32, i32) {
    %c0_i32 = arith.constant 0 : i32
    %c0_i32_0 = arith.constant 0 : i32
    return %arg0, %arg1, %c0_i32 : i32, i32, i32
  }
  func.func @transform_1(%arg0: i32, %arg1: i32, %arg2: i32) -> (i32, i32, i32) {
    %c0_i32 = arith.constant 0 : i32
    %c0_i32_0 = arith.constant 0 : i32
    return %arg0, %arg2, %c0_i32 : i32, i32, i32
  }
  func.func @transform_2(%arg0: i32, %arg1: i32, %arg2: i32) -> (i32, i32, i32) {
    %c0_i32 = arith.constant 0 : i32
    %c0_i32_0 = arith.constant 0 : i32
    return %arg0, %arg2, %c0_i32 : i32, i32, i32
  }
  func.func @transform_3(%arg0: i32, %arg1: i32, %arg2: i32) -> (i32, i32) {
    %c0_i32 = arith.constant 0 : i32
    %c0_i32_0 = arith.constant 0 : i32
    %c0_i32_1 = arith.constant 0 : i32
    return %c0_i32, %c0_i32_0 : i32, i32
  }
  func.func @transform_4(%arg0: i32, %arg1: i32, %arg2: i32) -> (i32, i32) {
    %c0_i32 = arith.constant 0 : i32
    %c0_i32_0 = arith.constant 0 : i32
    %c0_i32_1 = arith.constant 0 : i32
    return %c0_i32, %c0_i32_0 : i32, i32
  }
  func.func @transform_5(%arg0: i32, %arg1: i32, %arg2: i32) -> (i32, i32, i32) {
    %c0_i32 = arith.constant 0 : i32
    %c0_i32_0 = arith.constant 0 : i32
    return %arg0, %arg1, %c0_i32 : i32, i32, i32
  }
}

</mosaic_0001>

<llo_original>
// kernel: attention_forward.4
$region0: #{attention_forward.4}
  #allocation0 [shape = 'u32[]', space=smem, size = 0x4, offset = 0x4, fixed_abs, tag = 'smem constant byte address 0x4 - core index']
  #allocation1 [shape = 'u32[144,128]{1,0:T(1,128)}', space=vmem, size = 0x12000, scoped, tag = 'internal scratch']
  %s0 = inlined_call_operand.vmem [shape: bf16[32,32], index: 0, kind: input, shape index: {}]
  %s1 = inlined_call_operand.vmem [shape: bf16[32,128], index: 1, kind: input, shape index: {}]
  %s2 = inlined_call_operand.vmem [shape: bf16[1,128], index: 2, kind: input, shape index: {}]
  %s3 = inlined_call_operand.vmem [shape: bf16[32,128], index: 3, kind: output, shape index: {}]
  %s4 = sld [smem:[#allocation0]]
  $region45: #{attention_forward.4} parent=0
    _
  %s6 = ssub.s32 1, %s4
  %s7 = scalar_select 0, %s6, %s4
  loop: start=0, step=1, limit=4
  $region2: #{attention_forward.4} parent=0 // loop_pre_header
    _
  $region3: #{attention_forward.4} parent=0 // loop_header
    %s9 = sphi 0, %s13
    %p10 = scmp.ge.s32.totalorder %s9, 4
    %s19 = sphi 0, %s21
    %s22 = sphi 0, %s19
    %s23 = sphi 0, %s22
    %s39 = sphi 0, %s23
    %s43 = sphi 0, %s43
    %s45 = sphi 0, %s43
    %s46 = sphi 0, %s45
    %s60 = sphi 0, %s46
    %s64 = sphi 0, %s64
    %s66 = sphi 0, %s64
    %s67 = sphi 0, %s66
    %s81 = sphi 0, %s67
    %s87 = sphi 0, %s89
    %s90 = sphi 0, %s87
    %s91 = sphi 0, %s90
    %s107 = sphi 0, %s91
  $region4: #{attention_forward.4} parent=0 // loop_header_branch
    %12 = sbr.rel (%p10) target = $region8
  $region5: #{attention_forward.4} parent=0 // loop_body
    %s14 = ssub.s32 %s9, 1
    %s15 = ssub.s32 %s9, 2
    %s16 = sadd.s32 %s9, 1
    %s17 = ssub.s32 %s9, %s16
    %p18 = scmp.eq.s32.totalorder %s17, 0
    %s20 = sadd.s32 %s19, 1
    %s21 = scalar_select %p18, %s19, %s20
    %p24 = pneg %p18
    %p25 = scmp.eq.s32.totalorder %s9, 1
    %p26 = por %p24, %p25
    %p27 = scmp.ne.s32.totalorder %s19, %s22
    %p28 = scmp.eq.s32.totalorder %s9, 0
    %p29 = por %p27, %p28
    %p30 = scmp.ne.s32.totalorder %s19, %s22
    %p31 = scmp.eq.s32.totalorder %s14, 1
    %p32 = por %p30, %p31
    %p33 = scmp.ne.s32.totalorder %s22, %s23
    %p34 = scmp.eq.s32.totalorder %s14, 0
    %p35 = por %p33, %p34
    %p36 = scmp.ne.s32.totalorder %s22, %s23
    %p37 = scmp.eq.s32.totalorder %s15, 1
    %p38 = por %p36, %p37
    %p40 = scmp.ne.s32.totalorder %s23, %s39
    %p41 = scmp.eq.s32.totalorder %s15, 0
    %p42 = por %p40, %p41
    %s44 = sadd.s32 %s43, 1
    %p47 = scmp.eq.s32.totalorder %s9, 1
    %p48 = scmp.ne.s32.totalorder %s43, %s45
    %p49 = scmp.eq.s32.totalorder %s9, 0
    %p50 = por %p48, %p49
    %p51 = scmp.ne.s32.totalorder %s43, %s45
    %p52 = scmp.eq.s32.totalorder %s14, 1
    %p53 = por %p51, %p52
    %p54 = scmp.ne.s32.totalorder %s45, %s46
    %p55 = scmp.eq.s32.totalorder %s14, 0
    %p56 = por %p54, %p55
    %p57 = scmp.ne.s32.totalorder %s45, %s46
    %p58 = scmp.eq.s32.totalorder %s15, 1
    %p59 = por %p57, %p58
    %p61 = scmp.ne.s32.totalorder %s46, %s60
    %p62 = scmp.eq.s32.totalorder %s15, 0
    %p63 = por %p61, %p62
    %s65 = sadd.s32 %s64, 1
    %p68 = scmp.eq.s32.totalorder %s9, 1
    %p69 = scmp.ne.s32.totalorder %s64, %s66
    %p70 = scmp.eq.s32.totalorder %s9, 0
    %p71 = por %p69, %p70
    %p72 = scmp.ne.s32.totalorder %s64, %s66
    %p73 = scmp.eq.s32.totalorder %s14, 1
    %p74 = por %p72, %p73
    %p75 = scmp.ne.s32.totalorder %s66, %s67
    %p76 = scmp.eq.s32.totalorder %s14, 0
    %p77 = por %p75, %p76
    %p78 = scmp.ne.s32.totalorder %s66, %s67
    %p79 = scmp.eq.s32.totalorder %s15, 1
    %p80 = por %p78, %p79
    %p82 = scmp.ne.s32.totalorder %s67, %s81
    %p83 = scmp.eq.s32.totalorder %s15, 0
    %p84 = por %p82, %p83
    %s85 = ssub.s32 %s9, %s16
    %p86 = scmp.eq.s32.totalorder %s85, 0
    %s88 = sadd.s32 %s87, 1
    %s89 = scalar_select %p86, %s87, %s88
    %p92 = pneg %p86
    %p93 = scmp.eq.s32.totalorder %s9, 1
    %p94 = por %p92, %p93
    %p95 = scmp.ne.s32.totalorder %s87, %s90
    %p96 = scmp.eq.s32.totalorder %s9, 0
    %p97 = por %p95, %p96
    %p98 = scmp.ne.s32.totalorder %s87, %s90
    %p99 = scmp.eq.s32.totalorder %s14, 1
    %p100 = por %p98, %p99
    %p101 = scmp.ne.s32.totalorder %s90, %s91
    %p102 = scmp.eq.s32.totalorder %s14, 0
    %p103 = por %p101, %p102
    %p104 = scmp.ne.s32.totalorder %s90, %s91
    %p105 = scmp.eq.s32.totalorder %s15, 1
    %p106 = por %p104, %p105
    %p108 = scmp.ne.s32.totalorder %s91, %s107
    %p109 = scmp.eq.s32.totalorder %s15, 0
    %p110 = por %p108, %p109
    %p111 = scmp.le.s32.totalorder 1, %s9
    %p112 = scmp.lt.s32.totalorder %s9, 3
    %p113 = pnand %p111, %p112
    %p114 = pneg %p113
    // Predicated region
    $region9: #{attention_forward.4} parent=5 // pred_check
      _
    $region10: #{attention_forward.4} parent=5 // pred_check_branch
      %116 = sbr.rel (%p113) target = $region12
    $region11: #{attention_forward.4} parent=5 // pred_region
      %s117 = ssub.s32 %s9, 1
      // Predicated region
      $region13: #{attention_forward.4} parent=11 // pred_check
        %p118 = pneg %p56
      $region14: #{attention_forward.4} parent=11 // pred_check_branch
        %120 = sbr.rel (%p118) target = $region16
      $region15: #{attention_forward.4} parent=11 // pred_region
        _
      $region16: #{attention_forward.4} parent=11 // pred_fallthru
        _
      // Predicated region
      $region17: #{attention_forward.4} parent=11 // pred_check
        %p121 = pneg %p77
      $region18: #{attention_forward.4} parent=11 // pred_check_branch
        %123 = sbr.rel (%p121) target = $region20
      $region19: #{attention_forward.4} parent=11 // pred_region
        _
      $region20: #{attention_forward.4} parent=11 // pred_fallthru
        _
    $region12: #{attention_forward.4} parent=5 // pred_fallthru
      _
    %p124 = scmp.lt.s32.totalorder %s9, 2
    // Predicated region
    $region21: #{attention_forward.4} parent=5 // pred_check
      %p125 = pneg %p124
    $region22: #{attention_forward.4} parent=5 // pred_check_branch
      %127 = sbr.rel (%p125) target = $region24
    $region23: #{attention_forward.4} parent=5 // pred_region
      // Predicated region
      $region25: #{attention_forward.4} parent=23 // pred_check
        %p128 = pneg %p29
      $region26: #{attention_forward.4} parent=23 // pred_check_branch
        %130 = sbr.rel (%p128) target = $region28
      $region27: #{attention_forward.4} parent=23 // pred_region
        %s131 = smul.u32 2, %s9
        %p132 = scmp.lt.s32.totalorder %s131, 3
        %s133 = scalar_select %p132, %s131, 3
        %s134 = smul.addr %s133, 4
        %s135 = scalar_lea.vmem %s0, %s134
        %s136 = smul.u32 2, %s9
      $region28: #{attention_forward.4} parent=23 // pred_fallthru
        _
    $region24: #{attention_forward.4} parent=5 // pred_fallthru
      _
    %p137 = scmp.le.s32.totalorder 1, %s9
    %p138 = scmp.lt.s32.totalorder %s9, 3
    %p139 = pnand %p137, %p138
    %p140 = pneg %p139
    // Predicated region
    $region29: #{attention_forward.4} parent=5 // pred_check
      _
    $region30: #{attention_forward.4} parent=5 // pred_check_branch
      %142 = sbr.rel (%p139) target = $region32
    $region31: #{attention_forward.4} parent=5 // pred_region
      %s143 = ssub.s32 %s9, 1
      %s144 = smul.u32 2, %s14
      %p145 = scmp.lt.s32.totalorder %s144, 3
      %s146 = scalar_select %p145, %s144, 3
      %s147 = smul.addr %s146, 4
      %s148 = scalar_lea.vmem %s0, %s147
      %p149 = pneg %p35
      %p150 = pneg %p32
      %p151 = pneg %p56
      %p152 = pneg %p53
      %p153 = pneg %p77
      %p154 = pneg %p74
      %p155 = pneg %p103
      %p156 = pneg %p100
      %s157 = smul.u32 2, %s14
      %p158 = scmp.lt.s32.totalorder %s157, 3
      %s159 = scalar_select %p158, %s157, 3
      %s160 = smul.addr %s159, 4
      %s161 = scalar_lea.vmem %s3, %s160
      %s162 = smul.u32 2, %s14
      %p163 = scmp.lt.s32.totalorder %s162, 3
      %s164 = scalar_select %p163, %s162, 3
      %s165 = smul.addr %s164, 4
      %s166 = scalar_lea.vmem %s0, %s165
      %s167 = smul.u32 2, %s14
      %s168 = smul.u32 2, %s14
      %p169 = scmp.lt.s32.totalorder %s168, 3
      %s170 = scalar_select %p169, %s168, 3
      %s171 = smul.addr %s170, 4
      %s172 = scalar_lea.vmem %s3, %s171
      %s173 = smul.u32 2, %s14
      %v175 = vld [vmem:[%s166] sm:$0xf]
      %v176 = vld [vmem:[%s166 + $0x4] sm:$0xf]
      %v177 = vld [vmem:[%s1] sm:$0xf]
      %v178 = vld [vmem:[%s1 + $0x4] sm:$0xf]
      %v179 = vld [vmem:[%s1 + $0x8] sm:$0xf]
      %v180 = vld [vmem:[%s1 + $0xc] sm:$0xf]
      %v181 = vld [vmem:[%s2] sm:$0x1]
      %v182 = vunpack.c.l.bf16 %v181
      %v183 = vlaneseq
      %v184 = vshrl.u32 %v183, 7
      %v185 = vsub.s32 0, %v184
      %v186 = vrot.slane %v182, %v185
      %v189 = vunpack.c.l.b16 %v175
      %v190 = vunpack.c.l.b16 %v176
      %v191 = vpack.c.b16 %v190, %v189
      %v196 = vunpack.c.l.b16 %v177
      %v197 = vunpack.c.l.b16 %v178
      %v198 = vunpack.c.l.b16 %v179
      %v199 = vunpack.c.l.b16 %v180
      %v200 = vpack.c.b16 %v197, %v196
      %v201 = vpack.c.b16 %v199, %v198
      %vm204 = vcmask 261120
      %v206 = vsel %vm204, %v191, 0
      %208 = vmatprep.subr.bf16.mxu0 0
      %209 = vmatpush1.bf16.msra.mxu0 %v200
      %210 = vmatprep.subr.bf16.mxu0 0
      %211 = vmatpush1.bf16.msra.mxu0 %v201
      %212 = vmatprep.subr.bf16.mxu0 0
      %213 = vmatpush1.bf16.msra.mxu0 0
      %214 = vmatprep.subr.bf16.mxu0 0
      %215 = vmatpush1.bf16.msra.mxu0 0
      %216 = vmatprep.subr.bf16.mxu0 0
      %217 = vmatpush1.bf16.msra.mxu0 0
      %218 = vmatprep.subr.bf16.mxu0 0
      %219 = vmatpush1.bf16.msra.mxu0 0
      %220 = vmatprep.subr.bf16.mxu0 0
      %221 = vmatpush1.bf16.msra.mxu0 0
      %222 = vmatprep.subr.bf16.mxu0 0
      %223 = vmatpush1.bf16.msra.mxu0 0
      %224 = vmatprep.subr.bf16.mxu0 0
      %225 = vmatpush1.bf16.msra.mxu0 0
      %226 = vmatprep.subr.bf16.mxu0 0
      %227 = vmatpush1.bf16.msra.mxu0 0
      %228 = vmatprep.subr.bf16.mxu0 0
      %229 = vmatpush1.bf16.msra.mxu0 0
      %230 = vmatprep.subr.bf16.mxu0 0
      %231 = vmatpush1.bf16.msra.mxu0 0
      %232 = vmatprep.subr.bf16.mxu0 0
      %233 = vmatpush1.bf16.msra.mxu0 0
      %234 = vmatprep.subr.bf16.mxu0 0
      %235 = vmatpush1.bf16.msra.mxu0 0
      %236 = vmatprep.subr.bf16.mxu0 0
      %237 = vmatpush1.bf16.msra.mxu0 0
      %238 = vmatprep.subr.bf16.mxu0 0
      %239 = vmatpush1.bf16.msra.mxu0 0
      %240 = vmatprep.mubr.bf16.mxu0 0
      %241 = vmatmul.mubr.bf16.gmra.mrb[0].mxu0 %v206
      %v242 = vpop.f32.mrb[0].mxu0
      %v243 = vadd.f32 %v186, %v242
      %v244 = vpop.f32.mrb[0].mxu0
      %v245 = vpop.f32.mrb[0].mxu0
      %v246 = vadd.f32 %v186, %v245
      %v247 = vpop.f32.mrb[0].mxu0
      %248 = vdwg.mxu0
      %v249 = vpack.c.bf16 %v246, %v243
      %v251 = vunpack.c.l.b16 %v249
      %v252 = vunpack.c.h.b16 %v249
      %v253 = vpack.c.b16 %v251, %v251
      %v254 = vpack.c.b16 %v252, %v252
      %257 = vst [vmem:[%s172] sm:$0xf] %v253
      %258 = vst [vmem:[%s172 + $0x4] sm:$0xf] %v254
      %s259 = smul.u32 2, %s14
      %p260 = scmp.lt.s32.totalorder %s259, 3
      %s261 = scalar_select %p260, %s259, 3
      %s262 = smul.addr %s261, 4
      %s263 = scalar_lea.vmem %s3, %s262
      // Predicated region
      $region33: #{attention_forward.4} parent=31 // pred_check
        %p264 = pneg %p100
      $region34: #{attention_forward.4} parent=31 // pred_check_branch
        %266 = sbr.rel (%p264) target = $region36
      $region35: #{attention_forward.4} parent=31 // pred_region
        %s267 = smul.u32 2, %s14
      $region36: #{attention_forward.4} parent=31 // pred_fallthru
        _
    $region32: #{attention_forward.4} parent=5 // pred_fallthru
      _
    %p268 = scmp.le.s32.totalorder 2, %s9
    // Predicated region
    $region37: #{attention_forward.4} parent=5 // pred_check
      %p269 = pneg %p268
    $region38: #{attention_forward.4} parent=5 // pred_check_branch
      %271 = sbr.rel (%p269) target = $region40
    $region39: #{attention_forward.4} parent=5 // pred_region
      %s272 = ssub.s32 %s9, 2
      // Predicated region
      $region41: #{attention_forward.4} parent=39 // pred_check
        %p273 = pneg %p106
      $region42: #{attention_forward.4} parent=39 // pred_check_branch
        %275 = sbr.rel (%p273) target = $region44
      $region43: #{attention_forward.4} parent=39 // pred_region
        %s276 = smul.u32 2, %s15
        %p277 = scmp.lt.s32.totalorder %s276, 3
        %s278 = scalar_select %p277, %s276, 3
        %s279 = smul.addr %s278, 4
        %s280 = scalar_lea.vmem %s3, %s279
      $region44: #{attention_forward.4} parent=39 // pred_fallthru
        _
    $region40: #{attention_forward.4} parent=5 // pred_fallthru
      _
  $region6: #{attention_forward.4} parent=0 // loop_footer
    %s13 = sadd.s32 1, %s9
  $region7: #{attention_forward.4} parent=0 // loop_footer_branch
    %8 = sbr.rel target = $region3
  $region8: #{attention_forward.4} parent=0 // loop_exit
    _

// kernel: attention_forward.7
$region0: #{attention_forward.7}
  #allocation0 [shape = 'u32[]', space=smem, size = 0x4, offset = 0x4, fixed_abs, tag = 'smem constant byte address 0x4 - core index']
  #allocation1 [shape = 'u32[144,128]{1,0:T(1,128)}', space=vmem, size = 0x12000, scoped, tag = 'internal scratch']
  #allocation2 [shape = 'f32[16,1]{1,0:T(8,128)}', space=vmem, size = 0x2000, scoped, tag = 'scratch operand']
  #allocation3 [shape = 'f32[16,1]{1,0:T(8,128)}', space=vmem, size = 0x2000, scoped, tag = 'scratch operand']
  #allocation4 [shape = 'f32[16,128]{1,0:T(8,128)}', space=vmem, size = 0x2000, scoped, tag = 'scratch operand']
  %s0 = inlined_call_operand.vmem [shape: bf16[2,16,128], index: 0, kind: input, shape index: {}]
  %s1 = inlined_call_operand.vmem [shape: bf16[2,16,128], index: 1, kind: input, shape index: {}]
  %s2 = inlined_call_operand.vmem [shape: bf16[2,16,128], index: 2, kind: input, shape index: {}]
  %s3 = inlined_call_operand.vmem [shape: bf16[128,128], index: 3, kind: input, shape index: {}]
  %s4 = inlined_call_operand.vmem [shape: bf16[1,128], index: 4, kind: input, shape index: {}]
  %s5 = inlined_call_operand.vmem [shape: f32[2,16,128], index: 5, kind: output, shape index: {}]
  %s6 = sld [smem:[#allocation0]]
  $region69: #{attention_forward.7} parent=0
    _
  %s8 = ssub.s32 1, %s6
  %s9 = scalar_select 0, %s8, %s6
  loop: start=0, step=1, limit=4
  $region2: #{attention_forward.7} parent=0 // loop_pre_header
    _
  $region3: #{attention_forward.7} parent=0 // loop_header
    %s11 = sphi 0, %s15
    %p12 = scmp.ge.s32.totalorder %s11, 4
    %s18 = sphi 0, %s37
    %s19 = sphi 0, %s33
    %s20 = sphi 0, %s29
    %s21 = sphi 0, %s18
    %s22 = sphi 0, %s19
    %s23 = sphi 0, %s20
    %s24 = sphi 0, %s21
    %s25 = sphi 0, %s22
    %s26 = sphi 0, %s23
    %s42 = sphi 0, %s44
    %s45 = sphi 0, %s42
    %s46 = sphi 0, %s45
    %s62 = sphi 0, %s46
    %s70 = sphi 0, %s72
    %s73 = sphi 0, %s70
    %s74 = sphi 0, %s73
    %s90 = sphi 0, %s74
    %s98 = sphi 0, %s100
    %s101 = sphi 0, %s98
    %s102 = sphi 0, %s101
    %s118 = sphi 0, %s102
    %s122 = sphi 0, %s122
    %s124 = sphi 0, %s122
    %s125 = sphi 0, %s124
    %s139 = sphi 0, %s125
    %s143 = sphi 0, %s143
    %s145 = sphi 0, %s143
    %s146 = sphi 0, %s145
    %s160 = sphi 0, %s146
    %s168 = sphi 0, %s170
    %s171 = sphi 0, %s168
    %s172 = sphi 0, %s171
    %s188 = sphi 0, %s172
  $region4: #{attention_forward.7} parent=0 // loop_header_branch
    %14 = sbr.rel (%p12) target = $region8
  $region5: #{attention_forward.7} parent=0 // loop_body
    %s16 = ssub.s32 %s11, 1
    %s17 = ssub.s32 %s11, 2
    %s27 = sadd.s32 1, %s20
    %p28 = scmp.ge.s32.totalorder %s27, 1
    %s29 = scalar_select %p28, 0, %s27
    %s30 = sadd.s32 1, %s19
    %s31 = scalar_select %p28, %s30, %s19
    %p32 = scmp.ge.s32.totalorder %s31, 1
    %s33 = scalar_select %p32, 0, %s31
    %s34 = sadd.s32 1, %s18
    %s35 = scalar_select %p32, %s34, %s18
    %p36 = scmp.ge.s32.totalorder %s35, 2
    %s37 = scalar_select %p36, 0, %s35
    %s38 = ssub.s32 %s18, %s37
    %s39 = ssub.s32 %s19, %s33
    %s40 = sor.u32 %s38, %s39
    %p41 = scmp.eq.s32.totalorder %s40, 0
    %s43 = sadd.s32 %s42, 1
    %s44 = scalar_select %p41, %s42, %s43
    %p47 = pneg %p41
    %p48 = scmp.eq.s32.totalorder %s11, 1
    %p49 = por %p47, %p48
    %p50 = scmp.ne.s32.totalorder %s42, %s45
    %p51 = scmp.eq.s32.totalorder %s11, 0
    %p52 = por %p50, %p51
    %p53 = scmp.ne.s32.totalorder %s42, %s45
    %p54 = scmp.eq.s32.totalorder %s16, 1
    %p55 = por %p53, %p54
    %p56 = scmp.ne.s32.totalorder %s45, %s46
    %p57 = scmp.eq.s32.totalorder %s16, 0
    %p58 = por %p56, %p57
    %p59 = scmp.ne.s32.totalorder %s45, %s46
    %p60 = scmp.eq.s32.totalorder %s17, 1
    %p61 = por %p59, %p60
    %p63 = scmp.ne.s32.totalorder %s46, %s62
    %p64 = scmp.eq.s32.totalorder %s17, 0
    %p65 = por %p63, %p64
    %s66 = ssub.s32 %s18, %s37
    %s67 = ssub.s32 %s20, %s29
    %s68 = sor.u32 %s66, %s67
    %p69 = scmp.eq.s32.totalorder %s68, 0
    %s71 = sadd.s32 %s70, 1
    %s72 = scalar_select %p69, %s70, %s71
    %p75 = pneg %p69
    %p76 = scmp.eq.s32.totalorder %s11, 1
    %p77 = por %p75, %p76
    %p78 = scmp.ne.s32.totalorder %s70, %s73
    %p79 = scmp.eq.s32.totalorder %s11, 0
    %p80 = por %p78, %p79
    %p81 = scmp.ne.s32.totalorder %s70, %s73
    %p82 = scmp.eq.s32.totalorder %s16, 1
    %p83 = por %p81, %p82
    %p84 = scmp.ne.s32.totalorder %s73, %s74
    %p85 = scmp.eq.s32.totalorder %s16, 0
    %p86 = por %p84, %p85
    %p87 = scmp.ne.s32.totalorder %s73, %s74
    %p88 = scmp.eq.s32.totalorder %s17, 1
    %p89 = por %p87, %p88
    %p91 = scmp.ne.s32.totalorder %s74, %s90
    %p92 = scmp.eq.s32.totalorder %s17, 0
    %p93 = por %p91, %p92
    %s94 = ssub.s32 %s18, %s37
    %s95 = ssub.s32 %s20, %s29
    %s96 = sor.u32 %s94, %s95
    %p97 = scmp.eq.s32.totalorder %s96, 0
    %s99 = sadd.s32 %s98, 1
    %s100 = scalar_select %p97, %s98, %s99
    %p103 = pneg %p97
    %p104 = scmp.eq.s32.totalorder %s11, 1
    %p105 = por %p103, %p104
    %p106 = scmp.ne.s32.totalorder %s98, %s101
    %p107 = scmp.eq.s32.totalorder %s11, 0
    %p108 = por %p106, %p107
    %p109 = scmp.ne.s32.totalorder %s98, %s101
    %p110 = scmp.eq.s32.totalorder %s16, 1
    %p111 = por %p109, %p110
    %p112 = scmp.ne.s32.totalorder %s101, %s102
    %p113 = scmp.eq.s32.totalorder %s16, 0
    %p114 = por %p112, %p113
    %p115 = scmp.ne.s32.totalorder %s101, %s102
    %p116 = scmp.eq.s32.totalorder %s17, 1
    %p117 = por %p115, %p116
    %p119 = scmp.ne.s32.totalorder %s102, %s118
    %p120 = scmp.eq.s32.totalorder %s17, 0
    %p121 = por %p119, %p120
    %s123 = sadd.s32 %s122, 1
    %p126 = scmp.eq.s32.totalorder %s11, 1
    %p127 = scmp.ne.s32.totalorder %s122, %s124
    %p128 = scmp.eq.s32.totalorder %s11, 0
    %p129 = por %p127, %p128
    %p130 = scmp.ne.s32.totalorder %s122, %s124
    %p131 = scmp.eq.s32.totalorder %s16, 1
    %p132 = por %p130, %p131
    %p133 = scmp.ne.s32.totalorder %s124, %s125
    %p134 = scmp.eq.s32.totalorder %s16, 0
    %p135 = por %p133, %p134
    %p136 = scmp.ne.s32.totalorder %s124, %s125
    %p137 = scmp.eq.s32.totalorder %s17, 1
    %p138 = por %p136, %p137
    %p140 = scmp.ne.s32.totalorder %s125, %s139
    %p141 = scmp.eq.s32.totalorder %s17, 0
    %p142 = por %p140, %p141
    %s144 = sadd.s32 %s143, 1
    %p147 = scmp.eq.s32.totalorder %s11, 1
    %p148 = scmp.ne.s32.totalorder %s143, %s145
    %p149 = scmp.eq.s32.totalorder %s11, 0
    %p150 = por %p148, %p149
    %p151 = scmp.ne.s32.totalorder %s143, %s145
    %p152 = scmp.eq.s32.totalorder %s16, 1
    %p153 = por %p151, %p152
    %p154 = scmp.ne.s32.totalorder %s145, %s146
    %p155 = scmp.eq.s32.totalorder %s16, 0
    %p156 = por %p154, %p155
    %p157 = scmp.ne.s32.totalorder %s145, %s146
    %p158 = scmp.eq.s32.totalorder %s17, 1
    %p159 = por %p157, %p158
    %p161 = scmp.ne.s32.totalorder %s146, %s160
    %p162 = scmp.eq.s32.totalorder %s17, 0
    %p163 = por %p161, %p162
    %s164 = ssub.s32 %s18, %s37
    %s165 = ssub.s32 %s19, %s33
    %s166 = sor.u32 %s164, %s165
    %p167 = scmp.eq.s32.totalorder %s166, 0
    %s169 = sadd.s32 %s168, 1
    %s170 = scalar_select %p167, %s168, %s169
    %p173 = pneg %p167
    %p174 = scmp.eq.s32.totalorder %s11, 1
    %p175 = por %p173, %p174
    %p176 = scmp.ne.s32.totalorder %s168, %s171
    %p177 = scmp.eq.s32.totalorder %s11, 0
    %p178 = por %p176, %p177
    %p179 = scmp.ne.s32.totalorder %s168, %s171
    %p180 = scmp.eq.s32.totalorder %s16, 1
    %p181 = por %p179, %p180
    %p182 = scmp.ne.s32.totalorder %s171, %s172
    %p183 = scmp.eq.s32.totalorder %s16, 0
    %p184 = por %p182, %p183
    %p185 = scmp.ne.s32.totalorder %s171, %s172
    %p186 = scmp.eq.s32.totalorder %s17, 1
    %p187 = por %p185, %p186
    %p189 = scmp.ne.s32.totalorder %s172, %s188
    %p190 = scmp.eq.s32.totalorder %s17, 0
    %p191 = por %p189, %p190
    %p192 = scmp.le.s32.totalorder 1, %s11
    %p193 = scmp.lt.s32.totalorder %s11, 3
    %p194 = pnand %p192, %p193
    %p195 = pneg %p194
    // Predicated region
    $region9: #{attention_forward.7} parent=5 // pred_check
      _
    $region10: #{attention_forward.7} parent=5 // pred_check_branch
      %197 = sbr.rel (%p194) target = $region12
    $region11: #{attention_forward.7} parent=5 // pred_region
      %s198 = ssub.s32 %s11, 1
      // Predicated region
      $region13: #{attention_forward.7} parent=11 // pred_check
        %p199 = pneg %p135
      $region14: #{attention_forward.7} parent=11 // pred_check_branch
        %201 = sbr.rel (%p199) target = $region16
      $region15: #{attention_forward.7} parent=11 // pred_region
        _
      $region16: #{attention_forward.7} parent=11 // pred_fallthru
        _
      // Predicated region
      $region17: #{attention_forward.7} parent=11 // pred_check
        %p202 = pneg %p156
      $region18: #{attention_forward.7} parent=11 // pred_check_branch
        %204 = sbr.rel (%p202) target = $region20
      $region19: #{attention_forward.7} parent=11 // pred_region
        _
      $region20: #{attention_forward.7} parent=11 // pred_fallthru
        _
    $region12: #{attention_forward.7} parent=5 // pred_fallthru
      _
    %p205 = scmp.lt.s32.totalorder %s11, 2
    // Predicated region
    $region21: #{attention_forward.7} parent=5 // pred_check
      %p206 = pneg %p205
    $region22: #{attention_forward.7} parent=5 // pred_check_branch
      %208 = sbr.rel (%p206) target = $region24
    $region23: #{attention_forward.7} parent=5 // pred_region
      // Predicated region
      $region25: #{attention_forward.7} parent=23 // pred_check
        %p209 = pneg %p52
      $region26: #{attention_forward.7} parent=23 // pred_check_branch
        %211 = sbr.rel (%p209) target = $region28
      $region27: #{attention_forward.7} parent=23 // pred_region
        %s212 = smul.u32 2, %s19
        %p213 = scmp.lt.s32.totalorder %s18, 1
        %s214 = scalar_select %p213, %s18, 1
        %p215 = scmp.lt.s32.totalorder %s212, 1
        %s216 = scalar_select %p215, %s212, 1
        %s217 = smul.addr %s214, 2
        %s218 = sadd.s32 %s216, %s217
        %s219 = smul.addr %s218, 4
        %s220 = scalar_lea.vmem %s0, %s219
        %s221 = smul.u32 2, %s19
      $region28: #{attention_forward.7} parent=23 // pred_fallthru
        _
      // Predicated region
      $region29: #{attention_forward.7} parent=23 // pred_check
        %p222 = pneg %p80
      $region30: #{attention_forward.7} parent=23 // pred_check_branch
        %224 = sbr.rel (%p222) target = $region32
      $region31: #{attention_forward.7} parent=23 // pred_region
        %s225 = smul.u32 2, %s20
        %p226 = scmp.lt.s32.totalorder %s18, 1
        %s227 = scalar_select %p226, %s18, 1
        %p228 = scmp.lt.s32.totalorder %s225, 1
        %s229 = scalar_select %p228, %s225, 1
        %s230 = smul.addr %s227, 2
        %s231 = sadd.s32 %s229, %s230
        %s232 = smul.addr %s231, 4
        %s233 = scalar_lea.vmem %s1, %s232
        %s234 = smul.u32 2, %s20
      $region32: #{attention_forward.7} parent=23 // pred_fallthru
        _
      // Predicated region
      $region33: #{attention_forward.7} parent=23 // pred_check
        %p235 = pneg %p108
      $region34: #{attention_forward.7} parent=23 // pred_check_branch
        %237 = sbr.rel (%p235) target = $region36
      $region35: #{attention_forward.7} parent=23 // pred_region
        %s238 = smul.u32 2, %s20
        %p239 = scmp.lt.s32.totalorder %s18, 1
        %s240 = scalar_select %p239, %s18, 1
        %p241 = scmp.lt.s32.totalorder %s238, 1
        %s242 = scalar_select %p241, %s238, 1
        %s243 = smul.addr %s240, 2
        %s244 = sadd.s32 %s242, %s243
        %s245 = smul.addr %s244, 4
        %s246 = scalar_lea.vmem %s2, %s245
        %s247 = smul.u32 2, %s20
      $region36: #{attention_forward.7} parent=23 // pred_fallthru
        _
    $region24: #{attention_forward.7} parent=5 // pred_fallthru
      _
    %p248 = scmp.le.s32.totalorder 1, %s11
    %p249 = scmp.lt.s32.totalorder %s11, 3
    %p250 = pnand %p248, %p249
    %p251 = pneg %p250
    // Predicated region
    $region37: #{attention_forward.7} parent=5 // pred_check
      _
    $region38: #{attention_forward.7} parent=5 // pred_check_branch
      %253 = sbr.rel (%p250) target = $region40
    $region39: #{attention_forward.7} parent=5 // pred_region
      %s254 = ssub.s32 %s11, 1
      %s255 = smul.u32 2, %s22
      %p256 = scmp.lt.s32.totalorder %s21, 1
      %s257 = scalar_select %p256, %s21, 1
      %p258 = scmp.lt.s32.totalorder %s255, 1
      %s259 = scalar_select %p258, %s255, 1
      %s260 = smul.addr %s257, 2
      %s261 = sadd.s32 %s259, %s260
      %s262 = smul.addr %s261, 4
      %s263 = scalar_lea.vmem %s0, %s262
      %p264 = pneg %p58
      %p265 = pneg %p55
      %s266 = smul.u32 2, %s23
      %p267 = scmp.lt.s32.totalorder %s21, 1
      %s268 = scalar_select %p267, %s21, 1
      %p269 = scmp.lt.s32.totalorder %s266, 1
      %s270 = scalar_select %p269, %s266, 1
      %s271 = smul.addr %s268, 2
      %s272 = sadd.s32 %s270, %s271
      %s273 = smul.addr %s272, 4
      %s274 = scalar_lea.vmem %s1, %s273
      %p275 = pneg %p86
      %p276 = pneg %p83
      %s277 = smul.u32 2, %s23
      %p278 = scmp.lt.s32.totalorder %s21, 1
      %s279 = scalar_select %p278, %s21, 1
      %p280 = scmp.lt.s32.totalorder %s277, 1
      %s281 = scalar_select %p280, %s277, 1
      %s282 = smul.addr %s279, 2
      %s283 = sadd.s32 %s281, %s282
      %s284 = smul.addr %s283, 4
      %s285 = scalar_lea.vmem %s2, %s284
      %p286 = pneg %p114
      %p287 = pneg %p111
      %p288 = pneg %p135
      %p289 = pneg %p132
      %p290 = pneg %p156
      %p291 = pneg %p153
      %p292 = pneg %p184
      %p293 = pneg %p181
      %s294 = smul.u32 2, %s22
      %p295 = scmp.lt.s32.totalorder %s21, 1
      %s296 = scalar_select %p295, %s21, 1
      %p297 = scmp.lt.s32.totalorder %s294, 1
      %s298 = scalar_select %p297, %s294, 1
      %s299 = smul.addr %s296, 2
      %s300 = sadd.s32 %s298, %s299
      %s301 = smul.addr %s300, 8
      %s302 = scalar_lea.vmem %s5, %s301
      %s303 = smul.u32 2, %s22
      %p304 = scmp.lt.s32.totalorder %s21, 1
      %s305 = scalar_select %p304, %s21, 1
      %p306 = scmp.lt.s32.totalorder %s303, 1
      %s307 = scalar_select %p306, %s303, 1
      %s308 = smul.addr %s305, 2
      %s309 = sadd.s32 %s307, %s308
      %s310 = smul.addr %s309, 4
      %s311 = scalar_lea.vmem %s0, %s310
      %s312 = smul.u32 2, %s22
      %s313 = smul.u32 2, %s23
      %p314 = scmp.lt.s32.totalorder %s21, 1
      %s315 = scalar_select %p314, %s21, 1
      %p316 = scmp.lt.s32.totalorder %s313, 1
      %s317 = scalar_select %p316, %s313, 1
      %s318 = smul.addr %s315, 2
      %s319 = sadd.s32 %s317, %s318
      %s320 = smul.addr %s319, 4
      %s321 = scalar_lea.vmem %s1, %s320
      %s322 = smul.u32 2, %s23
      %s323 = smul.u32 2, %s23
      %p324 = scmp.lt.s32.totalorder %s21, 1
      %s325 = scalar_select %p324, %s21, 1
      %p326 = scmp.lt.s32.totalorder %s323, 1
      %s327 = scalar_select %p326, %s323, 1
      %s328 = smul.addr %s325, 2
      %s329 = sadd.s32 %s327, %s328
      %s330 = smul.addr %s329, 4
      %s331 = scalar_lea.vmem %s2, %s330
      %s332 = smul.u32 2, %s23
      %s333 = smul.u32 2, %s22
      %p334 = scmp.lt.s32.totalorder %s21, 1
      %s335 = scalar_select %p334, %s21, 1
      %p336 = scmp.lt.s32.totalorder %s333, 1
      %s337 = scalar_select %p336, %s333, 1
      %s338 = smul.addr %s335, 2
      %s339 = sadd.s32 %s337, %s338
      %s340 = smul.addr %s339, 8
      %s341 = scalar_lea.vmem %s5, %s340
      %s342 = smul.u32 2, %s22
      %p344 = scmp.eq.s32.totalorder %s23, 0
      // Predicated region
      $region41: #{attention_forward.7} parent=39 // pred_check
        %p345 = pneg %p344
      $region42: #{attention_forward.7} parent=39 // pred_check_branch
        %347 = sbr.rel (%p345) target = $region44
      $region43: #{attention_forward.7} parent=39 // pred_region
        %vm348 = vcmask 7168
        %349 = vst.msk [vmem:[#allocation2] sm:$0xff] %vm348, -1e+30
        %350 = vst.msk [vmem:[#allocation2 + $0x8] sm:$0xff] %vm348, -1e+30
        %351 = vst.msk [vmem:[#allocation3] sm:$0xff] %vm348, 0.0
        %352 = vst.msk [vmem:[#allocation3 + $0x8] sm:$0xff] %vm348, 0.0
        %353 = vst [vmem:[#allocation4] sm:$0xff] 0.0
        %354 = vst [vmem:[#allocation4 + $0x8] sm:$0xff] 0.0
      $region44: #{attention_forward.7} parent=39 // pred_fallthru
        _
      %v355 = vld [vmem:[%s311] sm:$0xf]
      %v356 = vld [vmem:[%s311 + $0x4] sm:$0xf]
      %v357 = vld [vmem:[%s321] sm:$0xf]
      %v358 = vld [vmem:[%s321 + $0x4] sm:$0xf]
      %v359 = vld [vmem:[%s331] sm:$0xf]
      %v360 = vld [vmem:[%s331 + $0x4] sm:$0xf]
      %v363 = vunpack.c.l.b16 %v355
      %v364 = vunpack.c.l.b16 %v356
      %v365 = vpack.c.b16 %v364, %v363
      %v369 = vunpack.c.l.b16 %v357
      %v370 = vunpack.c.l.b16 %v358
      %v371 = vpack.c.b16 %v370, %v369
      %373 = vmatprep.subr.bf16.mxu0 0
      %374 = vmatpush1.bf16.xpose.msra.mxu0 %v371
      %375 = vmatprep.subr.bf16.mxu0 0
      %376 = vmatpush1.bf16.xpose.msra.mxu0 0
      %377 = vmatprep.subr.bf16.mxu0 0
      %378 = vmatpush1.bf16.xpose.msra.mxu0 0
      %379 = vmatprep.subr.bf16.mxu0 0
      %380 = vmatpush1.bf16.xpose.msra.mxu0 0
      %381 = vmatprep.subr.bf16.mxu0 0
      %382 = vmatpush1.bf16.xpose.msra.mxu0 0
      %383 = vmatprep.subr.bf16.mxu0 0
      %384 = vmatpush1.bf16.xpose.msra.mxu0 0
      %385 = vmatprep.subr.bf16.mxu0 0
      %386 = vmatpush1.bf16.xpose.msra.mxu0 0
      %387 = vmatprep.subr.bf16.mxu0 0
      %388 = vmatpush1.bf16.xpose.msra.mxu0 0
      %389 = vmatprep.subr.bf16.mxu0 0
      %390 = vmatpush1.bf16.xpose.msra.mxu0 0
      %391 = vmatprep.subr.bf16.mxu0 0
      %392 = vmatpush1.bf16.xpose.msra.mxu0 0
      %393 = vmatprep.subr.bf16.mxu0 0
      %394 = vmatpush1.bf16.xpose.msra.mxu0 0
      %395 = vmatprep.subr.bf16.mxu0 0
      %396 = vmatpush1.bf16.xpose.msra.mxu0 0
      %397 = vmatprep.subr.bf16.mxu0 0
      %398 = vmatpush1.bf16.xpose.msra.mxu0 0
      %399 = vmatprep.subr.bf16.mxu0 0
      %400 = vmatpush1.bf16.xpose.msra.mxu0 0
      %401 = vmatprep.subr.bf16.mxu0 0
      %402 = vmatpush1.bf16.xpose.msra.mxu0 0
      %403 = vmatprep.subr.bf16.mxu0 0
      %404 = vmatpush1.bf16.xpose.msra.mxu0 0
      %405 = vmatprep.mubr.bf16.mxu0 0
      %406 = vmatmul.mubr.bf16.gmra.mrb[0].mxu0 %v365
      %v407 = vpop.f32.mrb[0].mxu0
      %v408 = vadd.f32 0.0, %v407
      %v409 = vpop.f32.mrb[0].mxu0
      %v410 = vpop.f32.mrb[0].mxu0
      %v411 = vadd.f32 0.0, %v410
      %v412 = vpop.f32.mrb[0].mxu0
      %413 = vdwg.mxu0
      %s414 = sadd.s32 %s23, 1
      %s415 = smul.u32 %s414, 16
      %p416 = scmp.gt.s32.totalorder %s415, 8
      // Predicated region
      $region45: #{attention_forward.7} parent=39 // pred_check
        %p417 = pneg %p416
      $region46: #{attention_forward.7} parent=39 // pred_check_branch
        %419 = sbr.rel (%p417) target = $region48
      $region47: #{attention_forward.7} parent=39 // pred_region
        %s420 = smul.u32 %s23, 16
        %v421 = vlaneseq
        %v422 = vand.u32 %v421, 127
        %v423 = vstv %s420
        %v424 = vadd.s32 %v423, %v422
        %vm425 = vcmp.lt.s32.totalorder %v424, 8
        %v426 = vsel %vm425, %v408, -1e+30
        %v427 = vsel %vm425, %v411, -1e+30
        %v428 = vld [vmem:[#allocation2] sm:$0xff]
        %v429 = vld [vmem:[#allocation2 + $0x8] sm:$0xff]
        %vm430 = vcmask 130048
        %v431 = vsel %vm430, %v426, -inf
        %432 = vmax.xlane.f32.xlu0 %v431
        %v433 = vpop.xlane.xlu0 %432
        %v434 = vsel %vm430, %v427, -inf
        %435 = vmax.xlane.f32.xlu0 %v434
        %v436 = vpop.xlane.xlu0 %435
        %v437 = vmax.f32 %v428, %v433
        %v438 = vmax.f32 %v429, %v436
        %v439 = vsub.f32 %v428, %v437
        %v440 = vsub.f32 %v429, %v438
        %v441 = vmul.f32 %v439, 1.442695
        %v442 = vpow.pop %v441
        %v443 = vmul.f32 %v440, 1.442695
        %v444 = vpow.pop %v443
        %446 = vset.pattern.permute.xlu0 0
        %447 = vperm.xlu0 %446, %v437
        %v448 = vpop.permute.xlu0 %447
        %451 = vset.pattern.permute.xlu0 0
        %452 = vperm.xlu0 %451, %v438
        %v453 = vpop.permute.xlu0 %452
        %v455 = vsub.f32 %v426, %v448
        %v456 = vsub.f32 %v427, %v453
        %v457 = vmul.f32 %v455, 1.442695
        %v458 = vpow.pop %v457
        %v459 = vmul.f32 %v456, 1.442695
        %v460 = vpow.pop %v459
        %v461 = vld [vmem:[#allocation3] sm:$0xff]
        %v462 = vld [vmem:[#allocation3 + $0x8] sm:$0xff]
        %v463 = vmul.f32 %v442, %v461
        %v464 = vmul.f32 %v444, %v462
        %v465 = vsel %vm430, %v458, 0.0
        %466 = vadd.xlane.f32.xlu0 %v465
        %v467 = vpop.xlane.xlu0 %466
        %v468 = vsel %vm430, %v460, 0.0
        %469 = vadd.xlane.f32.xlu0 %v468
        %v470 = vpop.xlane.xlu0 %469
        %v471 = vadd.f32 %v463, %v467
        %v472 = vadd.f32 %v464, %v470
        %vm473 = vcmask 7168
        %474 = vst.msk [vmem:[#allocation3] sm:$0xff] %vm473, %v471
        %475 = vst.msk [vmem:[#allocation3 + $0x8] sm:$0xff] %vm473, %v472
        %v476 = vld [vmem:[#allocation4] sm:$0xff]
        %v477 = vld [vmem:[#allocation4 + $0x8] sm:$0xff]
        %479 = vset.pattern.permute.xlu0 0
        %480 = vperm.xlu0 %479, %v442
        %v481 = vpop.permute.xlu0 %480
        %484 = vset.pattern.permute.xlu0 0
        %485 = vperm.xlu0 %484, %v444
        %v486 = vpop.permute.xlu0 %485
        %v488 = vmul.f32 %v481, %v476
        %v489 = vmul.f32 %v486, %v477
        %v490 = vpack.c.bf16 %v460, %v458
        %v493 = vunpack.c.l.b16 %v359
        %v494 = vunpack.c.l.b16 %v360
        %v495 = vpack.c.b16 %v494, %v493
        %v498 = vsel %vm430, %v490, 0
        %500 = vmatprep.subr.bf16.mxu0 0
        %501 = vmatpush1.bf16.msra.mxu0 %v495
        %502 = vmatprep.subr.bf16.mxu0 0
        %503 = vmatpush1.bf16.msra.mxu0 0
        %504 = vmatprep.subr.bf16.mxu0 0
        %505 = vmatpush1.bf16.msra.mxu0 0
        %506 = vmatprep.subr.bf16.mxu0 0
        %507 = vmatpush1.bf16.msra.mxu0 0
        %508 = vmatprep.subr.bf16.mxu0 0
        %509 = vmatpush1.bf16.msra.mxu0 0
        %510 = vmatprep.subr.bf16.mxu0 0
        %511 = vmatpush1.bf16.msra.mxu0 0
        %512 = vmatprep.subr.bf16.mxu0 0
        %513 = vmatpush1.bf16.msra.mxu0 0
        %514 = vmatprep.subr.bf16.mxu0 0
        %515 = vmatpush1.bf16.msra.mxu0 0
        %516 = vmatprep.subr.bf16.mxu0 0
        %517 = vmatpush1.bf16.msra.mxu0 0
        %518 = vmatprep.subr.bf16.mxu0 0
        %519 = vmatpush1.bf16.msra.mxu0 0
        %520 = vmatprep.subr.bf16.mxu0 0
        %521 = vmatpush1.bf16.msra.mxu0 0
        %522 = vmatprep.subr.bf16.mxu0 0
        %523 = vmatpush1.bf16.msra.mxu0 0
        %524 = vmatprep.subr.bf16.mxu0 0
        %525 = vmatpush1.bf16.msra.mxu0 0
        %526 = vmatprep.subr.bf16.mxu0 0
        %527 = vmatpush1.bf16.msra.mxu0 0
        %528 = vmatprep.subr.bf16.mxu0 0
        %529 = vmatpush1.bf16.msra.mxu0 0
        %530 = vmatprep.subr.bf16.mxu0 0
        %531 = vmatpush1.bf16.msra.mxu0 0
        %532 = vmatprep.mubr.bf16.mxu0 0
        %533 = vmatmul.mubr.bf16.gmra.mrb[0].mxu0 %v498
        %v534 = vpop.f32.mrb[0].mxu0
        %v535 = vadd.f32 0.0, %v534
        %v536 = vpop.f32.mrb[0].mxu0
        %v537 = vpop.f32.mrb[0].mxu0
        %v538 = vadd.f32 0.0, %v537
        %v539 = vpop.f32.mrb[0].mxu0
        %540 = vdwg.mxu0
        %v541 = vadd.f32 %v488, %v535
        %v542 = vadd.f32 %v489, %v538
        %543 = vst [vmem:[#allocation4] sm:$0xff] %v541
        %544 = vst [vmem:[#allocation4 + $0x8] sm:$0xff] %v542
        %545 = vst.msk [vmem:[#allocation2] sm:$0xff] %vm473, %v437
        %546 = vst.msk [vmem:[#allocation2 + $0x8] sm:$0xff] %vm473, %v438
      $region48: #{attention_forward.7} parent=39 // pred_fallthru
        _
      %p547 = scmp.le.s32.totalorder %s415, 8
      // Predicated region
      $region49: #{attention_forward.7} parent=39 // pred_check
        %p548 = pneg %p547
      $region50: #{attention_forward.7} parent=39 // pred_check_branch
        %550 = sbr.rel (%p548) target = $region52
      $region51: #{attention_forward.7} parent=39 // pred_region
        %v551 = vld [vmem:[#allocation2] sm:$0xff]
        %v552 = vld [vmem:[#allocation2 + $0x8] sm:$0xff]
        %vm553 = vcmask 130048
        %v554 = vsel %vm553, %v408, -inf
        %555 = vmax.xlane.f32.xlu0 %v554
        %v556 = vpop.xlane.xlu0 %555
        %v557 = vsel %vm553, %v411, -inf
        %558 = vmax.xlane.f32.xlu0 %v557
        %v559 = vpop.xlane.xlu0 %558
        %v560 = vmax.f32 %v551, %v556
        %v561 = vmax.f32 %v552, %v559
        %v562 = vsub.f32 %v551, %v560
        %v563 = vsub.f32 %v552, %v561
        %v564 = vmul.f32 %v562, 1.442695
        %v565 = vpow.pop %v564
        %v566 = vmul.f32 %v563, 1.442695
        %v567 = vpow.pop %v566
        %569 = vset.pattern.permute.xlu0 0
        %570 = vperm.xlu0 %569, %v560
        %v571 = vpop.permute.xlu0 %570
        %574 = vset.pattern.permute.xlu0 0
        %575 = vperm.xlu0 %574, %v561
        %v576 = vpop.permute.xlu0 %575
        %v578 = vsub.f32 %v408, %v571
        %v579 = vsub.f32 %v411, %v576
        %v580 = vmul.f32 %v578, 1.442695
        %v581 = vpow.pop %v580
        %v582 = vmul.f32 %v579, 1.442695
        %v583 = vpow.pop %v582
        %v584 = vld [vmem:[#allocation3] sm:$0xff]
        %v585 = vld [vmem:[#allocation3 + $0x8] sm:$0xff]
        %v586 = vmul.f32 %v565, %v584
        %v587 = vmul.f32 %v567, %v585
        %v588 = vsel %vm553, %v581, 0.0
        %589 = vadd.xlane.f32.xlu0 %v588
        %v590 = vpop.xlane.xlu0 %589
        %v591 = vsel %vm553, %v583, 0.0
        %592 = vadd.xlane.f32.xlu0 %v591
        %v593 = vpop.xlane.xlu0 %592
        %v594 = vadd.f32 %v586, %v590
        %v595 = vadd.f32 %v587, %v593
        %vm596 = vcmask 7168
        %597 = vst.msk [vmem:[#allocation3] sm:$0xff] %vm596, %v594
        %598 = vst.msk [vmem:[#allocation3 + $0x8] sm:$0xff] %vm596, %v595
        %v599 = vld [vmem:[#allocation4] sm:$0xff]
        %v600 = vld [vmem:[#allocation4 + $0x8] sm:$0xff]
        %602 = vset.pattern.permute.xlu0 0
        %603 = vperm.xlu0 %602, %v565
        %v604 = vpop.permute.xlu0 %603
        %607 = vset.pattern.permute.xlu0 0
        %608 = vperm.xlu0 %607, %v567
        %v609 = vpop.permute.xlu0 %608
        %v611 = vmul.f32 %v604, %v599
        %v612 = vmul.f32 %v609, %v600
        %v613 = vpack.c.bf16 %v583, %v581
        %v616 = vunpack.c.l.b16 %v359
        %v617 = vunpack.c.l.b16 %v360
        %v618 = vpack.c.b16 %v617, %v616
        %v621 = vsel %vm553, %v613, 0
        %623 = vmatprep.subr.bf16.mxu0 0
        %624 = vmatpush1.bf16.msra.mxu0 %v618
        %625 = vmatprep.subr.bf16.mxu0 0
        %626 = vmatpush1.bf16.msra.mxu0 0
        %627 = vmatprep.subr.bf16.mxu0 0
        %628 = vmatpush1.bf16.msra.mxu0 0
        %629 = vmatprep.subr.bf16.mxu0 0
        %630 = vmatpush1.bf16.msra.mxu0 0
        %631 = vmatprep.subr.bf16.mxu0 0
        %632 = vmatpush1.bf16.msra.mxu0 0
        %633 = vmatprep.subr.bf16.mxu0 0
        %634 = vmatpush1.bf16.msra.mxu0 0
        %635 = vmatprep.subr.bf16.mxu0 0
        %636 = vmatpush1.bf16.msra.mxu0 0
        %637 = vmatprep.subr.bf16.mxu0 0
        %638 = vmatpush1.bf16.msra.mxu0 0
        %639 = vmatprep.subr.bf16.mxu0 0
        %640 = vmatpush1.bf16.msra.mxu0 0
        %641 = vmatprep.subr.bf16.mxu0 0
        %642 = vmatpush1.bf16.msra.mxu0 0
        %643 = vmatprep.subr.bf16.mxu0 0
        %644 = vmatpush1.bf16.msra.mxu0 0
        %645 = vmatprep.subr.bf16.mxu0 0
        %646 = vmatpush1.bf16.msra.mxu0 0
        %647 = vmatprep.subr.bf16.mxu0 0
        %648 = vmatpush1.bf16.msra.mxu0 0
        %649 = vmatprep.subr.bf16.mxu0 0
        %650 = vmatpush1.bf16.msra.mxu0 0
        %651 = vmatprep.subr.bf16.mxu0 0
        %652 = vmatpush1.bf16.msra.mxu0 0
        %653 = vmatprep.subr.bf16.mxu0 0
        %654 = vmatpush1.bf16.msra.mxu0 0
        %655 = vmatprep.mubr.bf16.mxu0 0
        %656 = vmatmul.mubr.bf16.gmra.mrb[0].mxu0 %v621
        %v657 = vpop.f32.mrb[0].mxu0
        %v658 = vadd.f32 0.0, %v657
        %v659 = vpop.f32.mrb[0].mxu0
        %v660 = vpop.f32.mrb[0].mxu0
        %v661 = vadd.f32 0.0, %v660
        %v662 = vpop.f32.mrb[0].mxu0
        %663 = vdwg.mxu0
        %v664 = vadd.f32 %v611, %v658
        %v665 = vadd.f32 %v612, %v661
        %666 = vst [vmem:[#allocation4] sm:$0xff] %v664
        %667 = vst [vmem:[#allocation4 + $0x8] sm:$0xff] %v665
        %668 = vst.msk [vmem:[#allocation2] sm:$0xff] %vm596, %v560
        %669 = vst.msk [vmem:[#allocation2 + $0x8] sm:$0xff] %vm596, %v561
      $region52: #{attention_forward.7} parent=39 // pred_fallthru
        _
      // Predicated region
      $region53: #{attention_forward.7} parent=39 // pred_check
        %p670 = pneg %p344
      $region54: #{attention_forward.7} parent=39 // pred_check_branch
        %672 = sbr.rel (%p670) target = $region56
      $region55: #{attention_forward.7} parent=39 // pred_region
        %v673 = vld [vmem:[#allocation4] sm:$0xff]
        %v674 = vld [vmem:[#allocation4 + $0x8] sm:$0xff]
        %v675 = vld [vmem:[#allocation3] sm:$0xff]
        %v676 = vld [vmem:[#allocation3 + $0x8] sm:$0xff]
        %678 = vset.pattern.permute.xlu0 0
        %679 = vperm.xlu0 %678, %v675
        %v680 = vpop.permute.xlu0 %679
        %683 = vset.pattern.permute.xlu0 0
        %684 = vperm.xlu0 %683, %v676
        %v685 = vpop.permute.xlu0 %684
        %v687 = vrcp.pop %v680
        %v688 = vmul.f32 %v673, %v687
        %v689 = vrcp.pop %v685
        %v690 = vmul.f32 %v674, %v689
        %v691 = vpack.c.bf16 %v690, %v688
        %v692 = vld [vmem:[%s3] sm:$0xf]
        %v693 = vld [vmem:[%s3 + $0x4] sm:$0xf]
        %v694 = vld [vmem:[%s3 + $0x8] sm:$0xf]
        %v695 = vld [vmem:[%s3 + $0xc] sm:$0xf]
        %v696 = vld [vmem:[%s3 + $0x10] sm:$0xf]
        %v697 = vld [vmem:[%s3 + $0x14] sm:$0xf]
        %v698 = vld [vmem:[%s3 + $0x18] sm:$0xf]
        %v699 = vld [vmem:[%s3 + $0x1c] sm:$0xf]
        %v700 = vld [vmem:[%s3 + $0x20] sm:$0xf]
        %v701 = vld [vmem:[%s3 + $0x24] sm:$0xf]
        %v702 = vld [vmem:[%s3 + $0x28] sm:$0xf]
        %v703 = vld [vmem:[%s3 + $0x2c] sm:$0xf]
        %v704 = vld [vmem:[%s3 + $0x30] sm:$0xf]
        %v705 = vld [vmem:[%s3 + $0x34] sm:$0xf]
        %v706 = vld [vmem:[%s3 + $0x38] sm:$0xf]
        %v707 = vld [vmem:[%s3 + $0x3c] sm:$0xf]
        %v708 = vld [vmem:[%s4] sm:$0x1]
        %v709 = vunpack.c.l.bf16 %v708
        %v710 = vlaneseq
        %v711 = vshrl.u32 %v710, 7
        %v712 = vsub.s32 0, %v711
        %v713 = vrot.slane %v709, %v712
        %v730 = vunpack.c.l.b16 %v692
        %v731 = vunpack.c.l.b16 %v693
        %v732 = vunpack.c.l.b16 %v694
        %v733 = vunpack.c.l.b16 %v695
        %v734 = vunpack.c.l.b16 %v696
        %v735 = vunpack.c.l.b16 %v697
        %v736 = vunpack.c.l.b16 %v698
        %v737 = vunpack.c.l.b16 %v699
        %v738 = vunpack.c.l.b16 %v700
        %v739 = vunpack.c.l.b16 %v701
        %v740 = vunpack.c.l.b16 %v702
        %v741 = vunpack.c.l.b16 %v703
        %v742 = vunpack.c.l.b16 %v704
        %v743 = vunpack.c.l.b16 %v705
        %v744 = vunpack.c.l.b16 %v706
        %v745 = vunpack.c.l.b16 %v707
        %v746 = vpack.c.b16 %v731, %v730
        %v747 = vpack.c.b16 %v733, %v732
        %v748 = vpack.c.b16 %v735, %v734
        %v749 = vpack.c.b16 %v737, %v736
        %v750 = vpack.c.b16 %v739, %v738
        %v751 = vpack.c.b16 %v741, %v740
        %v752 = vpack.c.b16 %v743, %v742
        %v753 = vpack.c.b16 %v745, %v744
        %762 = vmatprep.subr.bf16.mxu0 0
        %763 = vmatpush1.bf16.msra.mxu0 %v746
        %764 = vmatprep.subr.bf16.mxu0 0
        %765 = vmatpush1.bf16.msra.mxu0 %v747
        %766 = vmatprep.subr.bf16.mxu0 0
        %767 = vmatpush1.bf16.msra.mxu0 %v748
        %768 = vmatprep.subr.bf16.mxu0 0
        %769 = vmatpush1.bf16.msra.mxu0 %v749
        %770 = vmatprep.subr.bf16.mxu0 0
        %771 = vmatpush1.bf16.msra.mxu0 %v750
        %772 = vmatprep.subr.bf16.mxu0 0
        %773 = vmatpush1.bf16.msra.mxu0 %v751
        %774 = vmatprep.subr.bf16.mxu0 0
        %775 = vmatpush1.bf16.msra.mxu0 %v752
        %776 = vmatprep.subr.bf16.mxu0 0
        %777 = vmatpush1.bf16.msra.mxu0 %v753
        %778 = vmatprep.subr.bf16.mxu0 0
        %779 = vmatpush1.bf16.msra.mxu0 0
        %780 = vmatprep.subr.bf16.mxu0 0
        %781 = vmatpush1.bf16.msra.mxu0 0
        %782 = vmatprep.subr.bf16.mxu0 0
        %783 = vmatpush1.bf16.msra.mxu0 0
        %784 = vmatprep.subr.bf16.mxu0 0
        %785 = vmatpush1.bf16.msra.mxu0 0
        %786 = vmatprep.subr.bf16.mxu0 0
        %787 = vmatpush1.bf16.msra.mxu0 0
        %788 = vmatprep.subr.bf16.mxu0 0
        %789 = vmatpush1.bf16.msra.mxu0 0
        %790 = vmatprep.subr.bf16.mxu0 0
        %791 = vmatpush1.bf16.msra.mxu0 0
        %792 = vmatprep.subr.bf16.mxu0 0
        %793 = vmatpush1.bf16.msra.mxu0 0
        %794 = vmatprep.mubr.bf16.mxu0 0
        %795 = vmatmul.mubr.bf16.gmra.mrb[0].mxu0 %v691
        %v796 = vpop.f32.mrb[0].mxu0
        %v797 = vadd.f32 %v713, %v796
        %v798 = vpop.f32.mrb[0].mxu0
        %v799 = vpop.f32.mrb[0].mxu0
        %v800 = vadd.f32 %v713, %v799
        %v801 = vpop.f32.mrb[0].mxu0
        %802 = vdwg.mxu0
        %803 = vst [vmem:[%s341] sm:$0xff] %v797
        %804 = vst [vmem:[%s341 + $0x8] sm:$0xff] %v800
      $region56: #{attention_forward.7} parent=39 // pred_fallthru
        _
      %s805 = smul.u32 2, %s22
      %p806 = scmp.lt.s32.totalorder %s21, 1
      %s807 = scalar_select %p806, %s21, 1
      %p808 = scmp.lt.s32.totalorder %s805, 1
      %s809 = scalar_select %p808, %s805, 1
      %s810 = smul.addr %s807, 2
      %s811 = sadd.s32 %s809, %s810
      %s812 = smul.addr %s811, 8
      %s813 = scalar_lea.vmem %s5, %s812
      // Predicated region
      $region57: #{attention_forward.7} parent=39 // pred_check
        %p814 = pneg %p181
      $region58: #{attention_forward.7} parent=39 // pred_check_branch
        %816 = sbr.rel (%p814) target = $region60
      $region59: #{attention_forward.7} parent=39 // pred_region
        %s817 = smul.u32 2, %s22
      $region60: #{attention_forward.7} parent=39 // pred_fallthru
        _
    $region40: #{attention_forward.7} parent=5 // pred_fallthru
      _
    %p818 = scmp.le.s32.totalorder 2, %s11
    // Predicated region
    $region61: #{attention_forward.7} parent=5 // pred_check
      %p819 = pneg %p818
    $region62: #{attention_forward.7} parent=5 // pred_check_branch
      %821 = sbr.rel (%p819) target = $region64
    $region63: #{attention_forward.7} parent=5 // pred_region
      %s822 = ssub.s32 %s11, 2
      // Predicated region
      $region65: #{attention_forward.7} parent=63 // pred_check
        %p823 = pneg %p187
      $region66: #{attention_forward.7} parent=63 // pred_check_branch
        %825 = sbr.rel (%p823) target = $region68
      $region67: #{attention_forward.7} parent=63 // pred_region
        %s826 = smul.u32 2, %s25
        %p827 = scmp.lt.s32.totalorder %s24, 1
        %s828 = scalar_select %p827, %s24, 1
        %p829 = scmp.lt.s32.totalorder %s826, 1
        %s830 = scalar_select %p829, %s826, 1
        %s831 = smul.addr %s828, 2
        %s832 = sadd.s32 %s830, %s831
        %s833 = smul.addr %s832, 8
        %s834 = scalar_lea.vmem %s5, %s833
      $region68: #{attention_forward.7} parent=63 // pred_fallthru
        _
    $region64: #{attention_forward.7} parent=5 // pred_fallthru
      _
  $region6: #{attention_forward.7} parent=0 // loop_footer
    %s15 = sadd.s32 1, %s11
  $region7: #{attention_forward.7} parent=0 // loop_footer_branch
    %10 = sbr.rel target = $region3
  $region8: #{attention_forward.7} parent=0 // loop_exit
    _

</llo_original>
